<compile_context>
chip_gen: v7x
topology: tpu7x:2x2x1
jax: 0.10.0
libtpu: 0.0.40
codegen_flags: <defaults>
</compile_context>

<pallas_src>
import functools
import math

import jax
import jax.numpy as jnp
from jax import lax
from jax.experimental import pallas as pl
from jax.experimental.pallas import tpu as pltpu


# ----------------------------- small helpers --------------------------------

def _round_up(x, m):
    return (x + m - 1) // m * m


def _pick_row_tile(m, cap=512):
    # Multiple of 16: valid sublane tiling for both f32 (8) and bf16 (16).
    tm = min(cap, _round_up(m, 16))
    # v7x megacore: make sure a "parallel" row axis has >= 2 steps when there
    # is a meaningful amount of work, so both TensorCores get a share.
    if m > 256 and _round_up(m, tm) // tm < 2:
        tm = max(16, _round_up(tm // 2, 16))
    return tm


def _pick_col_tile(n, cap=512):
    # Prefer 256-multiples (v6e/v7x MXU is 2x256x256); 384/128 only as
    # fallbacks (fine for the v5e 4x128x128 MXU).
    if n <= cap:
        return n
    for t in (512, 256, 384, 128):
        if t <= cap and n % t == 0:
            return t
    return n


def _pad_rows(x2d, m_pad):
    m = x2d.shape[0]
    if m_pad == m:
        return x2d
    return jnp.pad(x2d, ((0, m_pad - m), (0, 0)))


def _gelu_f32(y, approximate):
    if approximate:
        c = math.sqrt(2.0 / math.pi)
        return 0.5 * y * (1.0 + jnp.tanh(c * (y + 0.044715 * y * y * y)))
    return 0.5 * y * (1.0 + lax.erf(y * (1.0 / math.sqrt(2.0))))


def _compiler_params(dimension_semantics, vmem_limit_bytes=None):
    if vmem_limit_bytes is None:
        return pltpu.CompilerParams(dimension_semantics=dimension_semantics)
    return pltpu.CompilerParams(dimension_semantics=dimension_semantics,
                                vmem_limit_bytes=vmem_limit_bytes)


# --------------------- kernel: dense + bias (K-reduced) ----------------------

def _dense_kernel(x_ref, w_ref, b_ref, o_ref, acc_ref):
    kk = pl.program_id(2)

    @pl.when(kk == 0)
    def _():
        acc_ref[...] = jnp.zeros_like(acc_ref)

    acc_ref[...] += jnp.dot(x_ref[...], w_ref[...],
                            preferred_element_type=jnp.float32)

    @pl.when(kk == pl.num_programs(2) - 1)
    def _():
        o_ref[...] = (acc_ref[...] + b_ref[...]).astype(o_ref.dtype)


def dense(x2d, w, b, *, out_dtype=None, compute_dtype=jnp.bfloat16,
          tm_cap=512, tn_cap=512, tk_cap=1024, vmem_limit_bytes=None):
    """y = x2d @ w + b, tiled over (rows, out-cols, reduction)."""
    M, K = x2d.shape
    _, N = w.shape
    out_dtype = out_dtype or x2d.dtype
    tm = _pick_row_tile(M, tm_cap)
    tn = _pick_col_tile(N, tn_cap)
    tk = _pick_col_tile(K, tk_cap)
    m_pad = _round_up(M, tm)
    xp = _pad_rows(x2d, m_pad)
    if compute_dtype is not None:
        xp = xp.astype(compute_dtype)
        w = w.astype(compute_dtype)
    b2 = b.reshape(1, N).astype(jnp.float32)

    out = pl.pallas_call(
        _dense_kernel,
        out_shape=jax.ShapeDtypeStruct((m_pad, N), out_dtype),
        grid=(m_pad // tm, N // tn, K // tk),
        in_specs=[
            pl.BlockSpec((tm, tk), lambda i, j, k: (i, k)),
            pl.BlockSpec((tk, tn), lambda i, j, k: (k, j)),
            pl.BlockSpec((1, tn), lambda i, j, k: (0, j)),
        ],
        out_specs=pl.BlockSpec((tm, tn), lambda i, j, k: (i, j)),
        scratch_shapes=[pltpu.VMEM((tm, tn), jnp.float32)],
        compiler_params=_compiler_params(
            ("parallel", "parallel", "arbitrary"), vmem_limit_bytes),
    )(xp, w, b2)
    return out[:M]


# ------------------ kernel: fused multi-head self-attention ------------------
# Reads q/k/v directly from the [B, S, 3H] QKV projection (no HBM transposes),
# writes a lane-dense (tq, H) context tile with all heads concatenated.

def _mha_kernel(q_ref, kv_ref, bias_ref, o_ref, *, num_heads, scale,
                compute_dtype):
    H3 = q_ref.shape[-1]
    H = H3 // 3
    hd = H // num_heads

    q_all = q_ref[...]                       # (tq, 3H) stored dtype
    kv_all = kv_ref[...]                     # (S,  3H)
    bias = bias_ref[...].astype(jnp.float32)  # (1, S) additive -10000 mask

    ctxs = []
    for h in range(num_heads):               # static unroll over heads
        lo = h * hd
        q_h = q_all[:, lo:lo + hd].astype(compute_dtype)
        k_h = kv_all[:, H + lo:H + lo + hd].astype(compute_dtype)
        v_h = kv_all[:, 2 * H + lo:2 * H + lo + hd].astype(compute_dtype)

        # scores = q @ k^T (contract last dims; avoids an explicit transpose)
        s = lax.dot_general(q_h, k_h, (((1,), (1,)), ((), ())),
                            preferred_element_type=jnp.float32)
        s = s * scale + bias                 # f32 epilogue
        s = s - jnp.max(s, axis=-1, keepdims=True)
        p = jnp.exp(s)
        denom = jnp.sum(p, axis=-1, keepdims=True)
        ctx = jnp.dot(p.astype(compute_dtype), v_h,
                      preferred_element_type=jnp.float32)
        # Normalize the small (tq, hd) context instead of the (tq, S) probs.
        ctx = ctx * pl.reciprocal(denom, approx=True)
        ctxs.append(ctx)

    o_ref[...] = jnp.concatenate(ctxs, axis=-1).astype(o_ref.dtype)


def attention_fused(qkv3d, bias3d, *, num_heads, out_dtype,
                    compute_dtype=jnp.bfloat16, vmem_limit_bytes=None):
    """qkv3d: [B, S, 3H] (q|k|v); bias3d: [B, 1, S] additive mask bias."""
    B, S, H3 = qkv3d.shape
    H = H3 // 3
    hd = H // num_heads

    # Query tiling for longer sequences (keeps score tiles small).
    tq = S
    for t in (256, 128):
        if S > t and S % t == 0:
            tq = t
            break

    kernel = functools.partial(
        _mha_kernel, num_heads=num_heads, scale=1.0 / math.sqrt(hd),
        compute_dtype=compute_dtype if compute_dtype is not None
        else jnp.float32)

    return pl.pallas_call(
        kernel,
        out_shape=jax.ShapeDtypeStruct((B, S, H), out_dtype),
        grid=(B, S // tq),
        in_specs=[
            # q rows for this tile (full 3H width kept so the last block dim is
            # the full array dim; q columns are sliced in VMEM).
            pl.BlockSpec((None, tq, H3), lambda b, qi: (b, qi, 0)),
            # full-sequence rows for k/v (same HBM array, second view).
            pl.BlockSpec((None, S, H3), lambda b, qi: (b, 0, 0)),
            pl.BlockSpec((None, 1, S), lambda b, qi: (b, 0, 0)),
        ],
        out_specs=pl.BlockSpec((None, tq, H), lambda b, qi: (b, qi, 0)),
        compiler_params=_compiler_params(("parallel", "parallel"),
                                         vmem_limit_bytes),
    )(qkv3d, qkv3d, bias3d)


# -------- kernel: dense + residual + LayerNorm (self-output), K-reduced ------

def _dense_res_ln_kernel(x_ref, w_ref, b_ref, res_ref, g_ref, beta_ref, o_ref,
                         acc_ref, *, eps):
    kk = pl.program_id(1)

    @pl.when(kk == 0)
    def _():
        acc_ref[...] = jnp.zeros_like(acc_ref)

    acc_ref[...] += jnp.dot(x_ref[...], w_ref[...],
                            preferred_element_type=jnp.float32)

    @pl.when(kk == pl.num_programs(1) - 1)
    def _():
        y = acc_ref[...] + b_ref[...] + res_ref[...].astype(jnp.float32)
        mean = jnp.mean(y, axis=-1, keepdims=True)
        var = jnp.mean(jnp.square(y - mean), axis=-1, keepdims=True)
        y = (y - mean) * lax.rsqrt(var + eps)
        o_ref[...] = (y * g_ref[...] + beta_ref[...]).astype(o_ref.dtype)


def dense_residual_layernorm(x2d, w, b, residual2d, gamma, beta, *, eps,
                             out_dtype=None, compute_dtype=jnp.bfloat16,
                             tm_cap=512, tk_cap=1024, vmem_limit_bytes=None):
    M, K = x2d.shape
    _, H = w.shape
    out_dtype = out_dtype or residual2d.dtype
    tm = _pick_row_tile(M, tm_cap)
    tk = _pick_col_tile(K, tk_cap)
    m_pad = _round_up(M, tm)
    xp = _pad_rows(x2d, m_pad)
    rp = _pad_rows(residual2d, m_pad)
    if compute_dtype is not None:
        xp = xp.astype(compute_dtype)
        w = w.astype(compute_dtype)
    kernel = functools.partial(_dense_res_ln_kernel, eps=eps)
    out = pl.pallas_call(
        kernel,
        out_shape=jax.ShapeDtypeStruct((m_pad, H), out_dtype),
        grid=(m_pad // tm, K // tk),
        in_specs=[
            pl.BlockSpec((tm, tk), lambda i, k: (i, k)),
            pl.BlockSpec((tk, H), lambda i, k: (k, 0)),
            pl.BlockSpec((1, H), lambda i, k: (0, 0)),
            pl.BlockSpec((tm, H), lambda i, k: (i, 0)),
            pl.BlockSpec((1, H), lambda i, k: (0, 0)),
            pl.BlockSpec((1, H), lambda i, k: (0, 0)),
        ],
        out_specs=pl.BlockSpec((tm, H), lambda i, k: (i, 0)),
        scratch_shapes=[pltpu.VMEM((tm, H), jnp.float32)],
        compiler_params=_compiler_params(("parallel", "arbitrary"),
                                         vmem_limit_bytes),
    )(xp, w, b.reshape(1, H).astype(jnp.float32), rp,
      gamma.reshape(1, H).astype(jnp.float32),
      beta.reshape(1, H).astype(jnp.float32))
    return out[:M]


# -------- kernel: fused FFN (intermediate GELU + output + res + LN) ----------

def _ffn_kernel(x_ref, w1_ref, b1_ref, w2_ref, b2_ref, res_ref, g_ref, beta_ref,
                o_ref, acc_ref, *, eps, approximate_gelu):
    j = pl.program_id(1)

    @pl.when(j == 0)
    def _():
        acc_ref[...] = jnp.zeros_like(acc_ref)

    h = jnp.dot(x_ref[...], w1_ref[...], preferred_element_type=jnp.float32)
    h = _gelu_f32(h + b1_ref[...], approximate_gelu)
    acc_ref[...] += jnp.dot(h.astype(w2_ref.dtype), w2_ref[...],
                            preferred_element_type=jnp.float32)

    @pl.when(j == pl.num_programs(1) - 1)
    def _():
        y = acc_ref[...] + b2_ref[...] + res_ref[...].astype(jnp.float32)
        mean = jnp.mean(y, axis=-1, keepdims=True)
        var = jnp.mean(jnp.square(y - mean), axis=-1, keepdims=True)
        y = (y - mean) * lax.rsqrt(var + eps)
        o_ref[...] = (y * g_ref[...] + beta_ref[...]).astype(o_ref.dtype)


def ffn_fused(x2d, w1, b1, w2, b2, residual2d, gamma, beta, *, eps,
              approximate_gelu=False, out_dtype=None,
              compute_dtype=jnp.bfloat16, tm_cap=512, ti_cap=512,
              vmem_limit_bytes=None):
    M, H = x2d.shape
    _, I = w1.shape
    out_dtype = out_dtype or residual2d.dtype
    tm = _pick_row_tile(M, tm_cap)
    ti = _pick_col_tile(I, ti_cap)
    m_pad = _round_up(M, tm)
    xp = _pad_rows(x2d, m_pad)
    rp = _pad_rows(residual2d, m_pad)
    if compute_dtype is not None:
        xp = xp.astype(compute_dtype)
        w1 = w1.astype(compute_dtype)
        w2 = w2.astype(compute_dtype)

    # The W1/W2/b1 blocks are the only ones whose index changes every inner
    # step; give them a deeper pipeline when the reduction is long enough.
    k_steps = I // ti
    if k_steps >= 3:
        def _wspec(shape, idx):
            return pl.BlockSpec(shape, idx, pipeline_mode=pl.Buffered(3))
    else:
        def _wspec(shape, idx):
            return pl.BlockSpec(shape, idx)

    kernel = functools.partial(_ffn_kernel, eps=eps,
                               approximate_gelu=approximate_gelu)
    out = pl.pallas_call(
        kernel,
        out_shape=jax.ShapeDtypeStruct((m_pad, H), out_dtype),
        grid=(m_pad // tm, k_steps),
        in_specs=[
            pl.BlockSpec((tm, H), lambda i, j: (i, 0)),    # activations
            _wspec((H, ti), lambda i, j: (0, j)),          # W1 tile (I = reduction)
            _wspec((1, ti), lambda i, j: (0, j)),          # b1 tile
            _wspec((ti, H), lambda i, j: (j, 0)),          # W2 tile
            pl.BlockSpec((1, H), lambda i, j: (0, 0)),     # b2
            pl.BlockSpec((tm, H), lambda i, j: (i, 0)),    # residual
            pl.BlockSpec((1, H), lambda i, j: (0, 0)),     # LN gamma
            pl.BlockSpec((1, H), lambda i, j: (0, 0)),     # LN beta
        ],
        out_specs=pl.BlockSpec((tm, H), lambda i, j: (i, 0)),
        scratch_shapes=[pltpu.VMEM((tm, H), jnp.float32)],
        compiler_params=_compiler_params(("parallel", "arbitrary"),
                                         vmem_limit_bytes),
    )(xp, w1, b1.reshape(1, I).astype(jnp.float32), w2,
      b2.reshape(1, H).astype(jnp.float32), rp,
      gamma.reshape(1, H).astype(jnp.float32),
      beta.reshape(1, H).astype(jnp.float32))
    return out[:M]


# ------------------------------ layer / encoder ------------------------------

def bert_layer_forward(x, bias3, p, *, num_heads, eps, approximate_gelu=False,
                       compute_dtype=jnp.bfloat16, vmem_limit_bytes=None):
    B, S, H = x.shape
    M = B * S
    act_dtype = compute_dtype if compute_dtype is not None else jnp.float32
    x2d = x.reshape(M, H)

    # Fused QKV projection (weights concatenated [H, 3H] in q|k|v order).
    qkv = dense(x2d, p["wqkv"], p["bqkv"], out_dtype=act_dtype,
                compute_dtype=compute_dtype,
                vmem_limit_bytes=vmem_limit_bytes)            # [M, 3H]
    qkv3 = qkv.reshape(B, S, 3 * H)                           # free reshape

    ctx = attention_fused(qkv3, bias3, num_heads=num_heads,
                          out_dtype=act_dtype, compute_dtype=compute_dtype,
                          vmem_limit_bytes=vmem_limit_bytes)  # [B, S, H]
    ctx2d = ctx.reshape(M, H)                                 # free reshape

    attn_out = dense_residual_layernorm(
        ctx2d, p["wo"], p["bo"], x2d, p["ln1_g"], p["ln1_b"], eps=eps,
        out_dtype=act_dtype, compute_dtype=compute_dtype,
        vmem_limit_bytes=vmem_limit_bytes)

    out = ffn_fused(
        attn_out, p["w1"], p["b1"], p["w2"], p["b2"], attn_out,
        p["ln2_g"], p["ln2_b"], eps=eps, approximate_gelu=approximate_gelu,
        out_dtype=act_dtype, compute_dtype=compute_dtype,
        vmem_limit_bytes=vmem_limit_bytes)
    return out.reshape(B, S, H)


def bert_encoder_forward(x, mask, layer_params, *, num_heads, eps,
                         approximate_gelu=False, compute_dtype=jnp.bfloat16,
                         vmem_limit_bytes=None):
    B, S, H = x.shape
    # Additive attention bias, computed once and reused by every head / layer.
    bias3 = ((1.0 - mask.astype(jnp.float32)) * (-10000.0)).reshape(B, 1, S)
    h = x if compute_dtype is None else x.astype(compute_dtype)
    for p in layer_params:
        h = bert_layer_forward(h, bias3, p, num_heads=num_heads, eps=eps,
                               approximate_gelu=approximate_gelu,
                               compute_dtype=compute_dtype,
                               vmem_limit_bytes=vmem_limit_bytes)
    return h.astype(x.dtype)


# ------------------------------ reference (JAX) -------------------------------

def _reference_encoder(x, mask, layer_params, *, num_heads, eps):
    B, S, H = x.shape
    nh = num_heads
    hd = H // nh

    def layernorm(y, g, b):
        mean = jnp.mean(y, axis=-1, keepdims=True)
        var = jnp.mean((y - mean) ** 2, axis=-1, keepdims=True)
        return (y - mean) / jnp.sqrt(var + eps) * g + b

    # Scope high-precision matmuls to the reference only (no process-wide
    # config side effects).
    with jax.default_matmul_precision("highest"):
        h = x
        for p in layer_params:
            qkv = h @ p["wqkv"] + p["bqkv"]
            q, k, v = jnp.split(qkv, 3, axis=-1)

            def heads(t):
                return t.reshape(B, S, nh, hd).transpose(0, 2, 1, 3)

            q, k, v = heads(q), heads(k), heads(v)
            s = jnp.einsum("bhqd,bhkd->bhqk", q, k) / math.sqrt(hd)
            s = s + (1.0 - mask)[:, None, None, :] * (-10000.0)
            s = s - jnp.max(s, axis=-1, keepdims=True)
            pr = jnp.exp(s)
            pr = pr / jnp.sum(pr, axis=-1, keepdims=True)
            ctx = jnp.einsum("bhqk,bhkd->bhqd", pr, v)
            ctx = ctx.transpose(0, 2, 1, 3).reshape(B, S, H)
            attn_out = layernorm(ctx @ p["wo"] + p["bo"] + h,
                                 p["ln1_g"], p["ln1_b"])
            inter = attn_out @ p["w1"] + p["b1"]
            inter = 0.5 * inter * (1.0 + lax.erf(inter / math.sqrt(2.0)))
            h = layernorm(inter @ p["w2"] + p["b2"] + attn_out,
                          p["ln2_g"], p["ln2_b"])
        return h


# ------------------------------- params / main --------------------------------

def init_layer_params(key, H, I):
    ks = jax.random.split(key, 12)

    def linear(kw, kb, fan_in, fan_out):
        bound = 1.0 / math.sqrt(fan_in)
        w = jax.random.uniform(kw, (fan_in, fan_out), jnp.float32,
                               minval=-bound, maxval=bound)
        b = jax.random.uniform(kb, (fan_out,), jnp.float32,
                               minval=-bound, maxval=bound)
        return w, b

    wq, bq = linear(ks[0], ks[1], H, H)
    wk, bk = linear(ks[2], ks[3], H, H)
    wv, bv = linear(ks[4], ks[5], H, H)
    wo, bo = linear(ks[6], ks[7], H, H)
    w1, b1 = linear(ks[8], ks[9], H, I)
    w2, b2 = linear(ks[10], ks[11], I, H)
    return dict(
        wqkv=jnp.concatenate([wq, wk, wv], axis=1),
        bqkv=jnp.concatenate([bq, bk, bv], axis=0),
        wo=wo, bo=bo,
        ln1_g=jnp.ones((H,), jnp.float32), ln1_b=jnp.zeros((H,), jnp.float32),
        w1=w1, b1=b1, w2=w2, b2=b2,
        ln2_g=jnp.ones((H,), jnp.float32), ln2_b=jnp.zeros((H,), jnp.float32),
    )


if __name__ == "__main__":
    # Small config consistent with the module:
    #   hidden_size=32, num_attention_heads=4, intermediate_size=128,
    #   num_hidden_layers=2, layer_norm_eps=1e-12, batch=2, seq=8.
    B, S, H, I_SIZE = 2, 8, 32, 128
    NUM_HEADS, NUM_LAYERS, EPS = 4, 2, 1e-12

    key = jax.random.PRNGKey(0)
    kx, kp = jax.random.split(key)

    x = jax.random.normal(kx, (B, S, H), dtype=jnp.float32)
    mask = jnp.ones((B, S), dtype=jnp.float32)
    mask = mask.at[1, 6:].set(0.0)   # mask out the last two tokens of batch 1

    layer_keys = jax.random.split(kp, NUM_LAYERS)
    params = [init_layer_params(k, H, I_SIZE) for k in layer_keys]

    fwd = jax.jit(functools.partial(bert_encoder_forward,
                                    num_heads=NUM_HEADS, eps=EPS,
                                    compute_dtype=jnp.bfloat16))
    out = jax.block_until_ready(fwd(x, mask, params))

    ref = _reference_encoder(x, mask, params, num_heads=NUM_HEADS, eps=EPS)
    assert out.shape == (B, S, H)
    err = float(jnp.max(jnp.abs(out - ref)))
    # bf16 MXU inputs with f32 accumulation: allow bf16-level tolerance.
    assert jnp.allclose(out, ref, atol=5e-2, rtol=5e-2), f"max abs err {err}"

    print("KERNEL_OK")
</pallas_src>

<mosaic_0001>
module attributes {stable_mosaic.version = 11 : i64} {
  func.func @_dense_kernel(%arg0: i32, %arg1: i32, %arg2: i32, %arg3: memref<16x32xbf16, #tpu.memory_space<vmem>>, %arg4: memref<32x96xbf16, #tpu.memory_space<vmem>>, %arg5: memref<1x96xf32, #tpu.memory_space<vmem>>, %arg6: memref<16x96xbf16, #tpu.memory_space<vmem>>, %arg7: memref<16x96xf32, #tpu.memory_space<vmem>>) attributes {dimension_semantics = [#tpu.dimension_semantics<parallel>, #tpu.dimension_semantics<parallel>, #tpu.dimension_semantics<arbitrary>], iteration_bounds = array<i64: 1, 1, 1>, scalar_prefetch = 0 : i64, scratch_operands = 1 : i64, tpu.core_type = #tpu.core_type<tc>, window_params = [{transform_indices = @transform_0, window_bounds = array<i64: 16, 32>}, {transform_indices = @transform_1, window_bounds = array<i64: 32, 96>}, {transform_indices = @transform_2, window_bounds = array<i64: 1, 96>}, {transform_indices = @transform_3, window_bounds = array<i64: 16, 96>}]} {
    %c0_i32 = arith.constant 0 : i32
    %0 = arith.cmpi eq, %arg2, %c0_i32 : i32
    %1 = arith.extui %0 : i1 to i32
    %c0_i32_0 = arith.constant 0 : i32
    %2 = arith.cmpi ne, %1, %c0_i32_0 : i32
    scf.if %2 {
      %cst_10 = arith.constant 0.000000e+00 : f32
      %12 = vector.broadcast %cst_10 : f32 to vector<16x96xf32>
      %c0_11 = arith.constant 0 : index
      %c0_12 = arith.constant 0 : index
      %13 = vector.load %arg7[%c0_11, %c0_12] : memref<16x96xf32, #tpu.memory_space<vmem>>, vector<16x96xf32>
      tpu.vector_store %arg7[%c0_11, %c0_12], %12 {strides = array<i32>} : memref<16x96xf32, #tpu.memory_space<vmem>>, vector<16x96xf32>,
    } else {
    }
    %c0 = arith.constant 0 : index
    %c0_1 = arith.constant 0 : index
    %3 = vector.load %arg7[%c0, %c0_1] : memref<16x96xf32, #tpu.memory_space<vmem>>, vector<16x96xf32>
    %c0_2 = arith.constant 0 : index
    %c0_3 = arith.constant 0 : index
    %4 = vector.load %arg3[%c0_2, %c0_3] : memref<16x32xbf16, #tpu.memory_space<vmem>>, vector<16x32xbf16>
    %c0_4 = arith.constant 0 : index
    %c0_5 = arith.constant 0 : index
    %5 = vector.load %arg4[%c0_4, %c0_5] : memref<32x96xbf16, #tpu.memory_space<vmem>>, vector<32x96xbf16>
    %cst = arith.constant dense<0.000000e+00> : vector<16x96xf32>
    %6 = tpu.matmul %4, %5, %cst {dimension_numbers = #tpu.dot_dimension_numbers<[1], [0], [0], [1], [0, 0, 1, 1], [], []>} : vector<16x32xbf16>, vector<32x96xbf16>, vector<16x96xf32> -> vector<16x96xf32>
    %7 = arith.addf %3, %6 : vector<16x96xf32>
    %c0_6 = arith.constant 0 : index
    %c0_7 = arith.constant 0 : index
    %8 = vector.load %arg7[%c0_6, %c0_7] : memref<16x96xf32, #tpu.memory_space<vmem>>, vector<16x96xf32>
    tpu.vector_store %arg7[%c0_6, %c0_7], %7 {strides = array<i32>} : memref<16x96xf32, #tpu.memory_space<vmem>>, vector<16x96xf32>,
    %c0_i32_8 = arith.constant 0 : i32
    %9 = arith.cmpi eq, %arg2, %c0_i32_8 : i32
    %10 = arith.extui %9 : i1 to i32
    %c0_i32_9 = arith.constant 0 : i32
    %11 = arith.cmpi ne, %10, %c0_i32_9 : i32
    scf.if %11 {
      %c0_10 = arith.constant 0 : index
      %c0_11 = arith.constant 0 : index
      %12 = vector.load %arg7[%c0_10, %c0_11] : memref<16x96xf32, #tpu.memory_space<vmem>>, vector<16x96xf32>
      %c0_12 = arith.constant 0 : index
      %c0_13 = arith.constant 0 : index
      %13 = vector.load %arg5[%c0_12, %c0_13] : memref<1x96xf32, #tpu.memory_space<vmem>>, vector<1x96xf32>
      %14 = vector.broadcast %13 : vector<1x96xf32> to vector<16x96xf32>
      %15 = arith.addf %12, %14 : vector<16x96xf32>
      %16 = arith.truncf %15 : vector<16x96xf32> to vector<16x96xbf16>
      %c0_14 = arith.constant 0 : index
      %c0_15 = arith.constant 0 : index
      %17 = vector.load %arg6[%c0_14, %c0_15] : memref<16x96xbf16, #tpu.memory_space<vmem>>, vector<16x96xbf16>
      tpu.vector_store %arg6[%c0_14, %c0_15], %16 {strides = array<i32>} : memref<16x96xbf16, #tpu.memory_space<vmem>>, vector<16x96xbf16>,
    } else {
    }
    return
  }
  func.func @transform_0(%arg0: i32, %arg1: i32, %arg2: i32) -> (i32, i32) {
    %c0_i32 = arith.constant 0 : i32
    return %arg0, %arg2 : i32, i32
  }
  func.func @transform_1(%arg0: i32, %arg1: i32, %arg2: i32) -> (i32, i32) {
    %c0_i32 = arith.constant 0 : i32
    return %arg2, %arg1 : i32, i32
  }
  func.func @transform_2(%arg0: i32, %arg1: i32, %arg2: i32) -> (i32, i32) {
    %c0_i32 = arith.constant 0 : i32
    %c0_i32_0 = arith.constant 0 : i32
    return %c0_i32, %arg1 : i32, i32
  }
  func.func @transform_3(%arg0: i32, %arg1: i32, %arg2: i32) -> (i32, i32) {
    %c0_i32 = arith.constant 0 : i32
    return %arg0, %arg1 : i32, i32
  }
}

module attributes {stable_mosaic.version = 11 : i64} {
  func.func @_mha_kernel(%arg0: i32, %arg1: i32, %arg2: memref<1x8x96xbf16, #tpu.memory_space<vmem>>, %arg3: memref<1x8x96xbf16, #tpu.memory_space<vmem>>, %arg4: memref<1x1x8xf32, #tpu.memory_space<vmem>>, %arg5: memref<1x8x32xbf16, #tpu.memory_space<vmem>>) attributes {dimension_semantics = [#tpu.dimension_semantics<parallel>, #tpu.dimension_semantics<parallel>], iteration_bounds = array<i64: 2, 1>, scalar_prefetch = 0 : i64, scratch_operands = 0 : i64, tpu.core_type = #tpu.core_type<tc>, window_params = [{transform_indices = @transform_0, window_bounds = array<i64: 1, 8, 96>}, {transform_indices = @transform_1, window_bounds = array<i64: 1, 8, 96>}, {transform_indices = @transform_2, window_bounds = array<i64: 1, 1, 8>}, {transform_indices = @transform_3, window_bounds = array<i64: 1, 8, 32>}]} {
    %c0 = arith.constant 0 : index
    %c0_0 = arith.constant 0 : index
    %c0_1 = arith.constant 0 : index
    %0 = vector.load %arg2[%c0, %c0_0, %c0_1] : memref<1x8x96xbf16, #tpu.memory_space<vmem>>, vector<1x8x96xbf16>
    %1 = vector.shape_cast %0 : vector<1x8x96xbf16> to vector<8x96xbf16>
    %c0_2 = arith.constant 0 : index
    %c0_3 = arith.constant 0 : index
    %c0_4 = arith.constant 0 : index
    %2 = vector.load %arg3[%c0_2, %c0_3, %c0_4] : memref<1x8x96xbf16, #tpu.memory_space<vmem>>, vector<1x8x96xbf16>
    %3 = vector.shape_cast %2 : vector<1x8x96xbf16> to vector<8x96xbf16>
    %c0_5 = arith.constant 0 : index
    %c0_6 = arith.constant 0 : index
    %c0_7 = arith.constant 0 : index
    %4 = vector.load %arg4[%c0_5, %c0_6, %c0_7] : memref<1x1x8xf32, #tpu.memory_space<vmem>>, vector<1x1x8xf32>
    %5 = vector.shape_cast %4 : vector<1x1x8xf32> to vector<1x8xf32>
    %6 = vector.extract_strided_slice %1 {offsets = [0, 0], sizes = [8, 8], strides = [1, 1]} : vector<8x96xbf16> to vector<8x8xbf16>
    %7 = vector.extract_strided_slice %3 {offsets = [0, 32], sizes = [8, 8], strides = [1, 1]} : vector<8x96xbf16> to vector<8x8xbf16>
    %8 = vector.extract_strided_slice %3 {offsets = [0, 64], sizes = [8, 8], strides = [1, 1]} : vector<8x96xbf16> to vector<8x8xbf16>
    %cst = arith.constant dense<0.000000e+00> : vector<8x8xf32>
    %9 = tpu.matmul %6, %7, %cst {dimension_numbers = #tpu.dot_dimension_numbers<[1], [1], [0], [0], [0, 0, 1, 0], [], []>} : vector<8x8xbf16>, vector<8x8xbf16>, vector<8x8xf32> -> vector<8x8xf32>
    %cst_8 = arith.constant 0.353553385 : f32
    %10 = vector.broadcast %cst_8 : f32 to vector<8x8xf32>
    %11 = arith.mulf %9, %10 : vector<8x8xf32>
    %12 = vector.broadcast %5 : vector<1x8xf32> to vector<8x8xf32>
    %13 = arith.addf %11, %12 : vector<8x8xf32>
    %cst_9 = arith.constant dense<0xFF800000> : vector<8xf32>
    %14 = vector.multi_reduction <maximumf>, %13, %cst_9 [1] : vector<8x8xf32> to vector<8xf32>
    %15 = vector.shape_cast %14 : vector<8xf32> to vector<8x1xf32>
    %16 = vector.broadcast %15 : vector<8x1xf32> to vector<8x8xf32>
    %17 = arith.subf %13, %16 : vector<8x8xf32>
    %18 = math.exp %17 : vector<8x8xf32>
    %cst_10 = arith.constant dense<0.000000e+00> : vector<8xf32>
    %19 = vector.multi_reduction <add>, %18, %cst_10 [1] : vector<8x8xf32> to vector<8xf32>
    %20 = vector.shape_cast %19 : vector<8xf32> to vector<8x1xf32>
    %21 = arith.truncf %18 : vector<8x8xf32> to vector<8x8xbf16>
    %cst_11 = arith.constant dense<0.000000e+00> : vector<8x8xf32>
    %22 = tpu.matmul %21, %8, %cst_11 {dimension_numbers = #tpu.dot_dimension_numbers<[1], [0], [0], [1], [0, 0, 1, 1], [], []>} : vector<8x8xbf16>, vector<8x8xbf16>, vector<8x8xf32> -> vector<8x8xf32>
    %23 = tpu.reciprocal %20 {approx = true} : vector<8x1xf32> -> vector<8x1xf32>
    %24 = vector.broadcast %23 : vector<8x1xf32> to vector<8x8xf32>
    %25 = arith.mulf %22, %24 : vector<8x8xf32>
    %26 = vector.extract_strided_slice %1 {offsets = [0, 8], sizes = [8, 8], strides = [1, 1]} : vector<8x96xbf16> to vector<8x8xbf16>
    %27 = vector.extract_strided_slice %3 {offsets = [0, 40], sizes = [8, 8], strides = [1, 1]} : vector<8x96xbf16> to vector<8x8xbf16>
    %28 = vector.extract_strided_slice %3 {offsets = [0, 72], sizes = [8, 8], strides = [1, 1]} : vector<8x96xbf16> to vector<8x8xbf16>
    %cst_12 = arith.constant dense<0.000000e+00> : vector<8x8xf32>
    %29 = tpu.matmul %26, %27, %cst_12 {dimension_numbers = #tpu.dot_dimension_numbers<[1], [1], [0], [0], [0, 0, 1, 0], [], []>} : vector<8x8xbf16>, vector<8x8xbf16>, vector<8x8xf32> -> vector<8x8xf32>
    %cst_13 = arith.constant 0.353553385 : f32
    %30 = vector.broadcast %cst_13 : f32 to vector<8x8xf32>
    %31 = arith.mulf %29, %30 : vector<8x8xf32>
    %32 = vector.broadcast %5 : vector<1x8xf32> to vector<8x8xf32>
    %33 = arith.addf %31, %32 : vector<8x8xf32>
    %cst_14 = arith.constant dense<0xFF800000> : vector<8xf32>
    %34 = vector.multi_reduction <maximumf>, %33, %cst_14 [1] : vector<8x8xf32> to vector<8xf32>
    %35 = vector.shape_cast %34 : vector<8xf32> to vector<8x1xf32>
    %36 = vector.broadcast %35 : vector<8x1xf32> to vector<8x8xf32>
    %37 = arith.subf %33, %36 : vector<8x8xf32>
    %38 = math.exp %37 : vector<8x8xf32>
    %cst_15 = arith.constant dense<0.000000e+00> : vector<8xf32>
    %39 = vector.multi_reduction <add>, %38, %cst_15 [1] : vector<8x8xf32> to vector<8xf32>
    %40 = vector.shape_cast %39 : vector<8xf32> to vector<8x1xf32>
    %41 = arith.truncf %38 : vector<8x8xf32> to vector<8x8xbf16>
    %cst_16 = arith.constant dense<0.000000e+00> : vector<8x8xf32>
    %42 = tpu.matmul %41, %28, %cst_16 {dimension_numbers = #tpu.dot_dimension_numbers<[1], [0], [0], [1], [0, 0, 1, 1], [], []>} : vector<8x8xbf16>, vector<8x8xbf16>, vector<8x8xf32> -> vector<8x8xf32>
    %43 = tpu.reciprocal %40 {approx = true} : vector<8x1xf32> -> vector<8x1xf32>
    %44 = vector.broadcast %43 : vector<8x1xf32> to vector<8x8xf32>
    %45 = arith.mulf %42, %44 : vector<8x8xf32>
    %46 = vector.extract_strided_slice %1 {offsets = [0, 16], sizes = [8, 8], strides = [1, 1]} : vector<8x96xbf16> to vector<8x8xbf16>
    %47 = vector.extract_strided_slice %3 {offsets = [0, 48], sizes = [8, 8], strides = [1, 1]} : vector<8x96xbf16> to vector<8x8xbf16>
    %48 = vector.extract_strided_slice %3 {offsets = [0, 80], sizes = [8, 8], strides = [1, 1]} : vector<8x96xbf16> to vector<8x8xbf16>
    %cst_17 = arith.constant dense<0.000000e+00> : vector<8x8xf32>
    %49 = tpu.matmul %46, %47, %cst_17 {dimension_numbers = #tpu.dot_dimension_numbers<[1], [1], [0], [0], [0, 0, 1, 0], [], []>} : vector<8x8xbf16>, vector<8x8xbf16>, vector<8x8xf32> -> vector<8x8xf32>
    %cst_18 = arith.constant 0.353553385 : f32
    %50 = vector.broadcast %cst_18 : f32 to vector<8x8xf32>
    %51 = arith.mulf %49, %50 : vector<8x8xf32>
    %52 = vector.broadcast %5 : vector<1x8xf32> to vector<8x8xf32>
    %53 = arith.addf %51, %52 : vector<8x8xf32>
    %cst_19 = arith.constant dense<0xFF800000> : vector<8xf32>
    %54 = vector.multi_reduction <maximumf>, %53, %cst_19 [1] : vector<8x8xf32> to vector<8xf32>
    %55 = vector.shape_cast %54 : vector<8xf32> to vector<8x1xf32>
    %56 = vector.broadcast %55 : vector<8x1xf32> to vector<8x8xf32>
    %57 = arith.subf %53, %56 : vector<8x8xf32>
    %58 = math.exp %57 : vector<8x8xf32>
    %cst_20 = arith.constant dense<0.000000e+00> : vector<8xf32>
    %59 = vector.multi_reduction <add>, %58, %cst_20 [1] : vector<8x8xf32> to vector<8xf32>
    %60 = vector.shape_cast %59 : vector<8xf32> to vector<8x1xf32>
    %61 = arith.truncf %58 : vector<8x8xf32> to vector<8x8xbf16>
    %cst_21 = arith.constant dense<0.000000e+00> : vector<8x8xf32>
    %62 = tpu.matmul %61, %48, %cst_21 {dimension_numbers = #tpu.dot_dimension_numbers<[1], [0], [0], [1], [0, 0, 1, 1], [], []>} : vector<8x8xbf16>, vector<8x8xbf16>, vector<8x8xf32> -> vector<8x8xf32>
    %63 = tpu.reciprocal %60 {approx = true} : vector<8x1xf32> -> vector<8x1xf32>
    %64 = vector.broadcast %63 : vector<8x1xf32> to vector<8x8xf32>
    %65 = arith.mulf %62, %64 : vector<8x8xf32>
    %66 = vector.extract_strided_slice %1 {offsets = [0, 24], sizes = [8, 8], strides = [1, 1]} : vector<8x96xbf16> to vector<8x8xbf16>
    %67 = vector.extract_strided_slice %3 {offsets = [0, 56], sizes = [8, 8], strides = [1, 1]} : vector<8x96xbf16> to vector<8x8xbf16>
    %68 = vector.extract_strided_slice %3 {offsets = [0, 88], sizes = [8, 8], strides = [1, 1]} : vector<8x96xbf16> to vector<8x8xbf16>
    %cst_22 = arith.constant dense<0.000000e+00> : vector<8x8xf32>
    %69 = tpu.matmul %66, %67, %cst_22 {dimension_numbers = #tpu.dot_dimension_numbers<[1], [1], [0], [0], [0, 0, 1, 0], [], []>} : vector<8x8xbf16>, vector<8x8xbf16>, vector<8x8xf32> -> vector<8x8xf32>
    %cst_23 = arith.constant 0.353553385 : f32
    %70 = vector.broadcast %cst_23 : f32 to vector<8x8xf32>
    %71 = arith.mulf %69, %70 : vector<8x8xf32>
    %72 = vector.broadcast %5 : vector<1x8xf32> to vector<8x8xf32>
    %73 = arith.addf %71, %72 : vector<8x8xf32>
    %cst_24 = arith.constant dense<0xFF800000> : vector<8xf32>
    %74 = vector.multi_reduction <maximumf>, %73, %cst_24 [1] : vector<8x8xf32> to vector<8xf32>
    %75 = vector.shape_cast %74 : vector<8xf32> to vector<8x1xf32>
    %76 = vector.broadcast %75 : vector<8x1xf32> to vector<8x8xf32>
    %77 = arith.subf %73, %76 : vector<8x8xf32>
    %78 = math.exp %77 : vector<8x8xf32>
    %cst_25 = arith.constant dense<0.000000e+00> : vector<8xf32>
    %79 = vector.multi_reduction <add>, %78, %cst_25 [1] : vector<8x8xf32> to vector<8xf32>
    %80 = vector.shape_cast %79 : vector<8xf32> to vector<8x1xf32>
    %81 = arith.truncf %78 : vector<8x8xf32> to vector<8x8xbf16>
    %cst_26 = arith.constant dense<0.000000e+00> : vector<8x8xf32>
    %82 = tpu.matmul %81, %68, %cst_26 {dimension_numbers = #tpu.dot_dimension_numbers<[1], [0], [0], [1], [0, 0, 1, 1], [], []>} : vector<8x8xbf16>, vector<8x8xbf16>, vector<8x8xf32> -> vector<8x8xf32>
    %83 = tpu.reciprocal %80 {approx = true} : vector<8x1xf32> -> vector<8x1xf32>
    %84 = vector.broadcast %83 : vector<8x1xf32> to vector<8x8xf32>
    %85 = arith.mulf %82, %84 : vector<8x8xf32>
    %86 = tpu.concatenate %25, %45, %65, %85 in 1 : vector<8x8xf32>, vector<8x8xf32>, vector<8x8xf32>, vector<8x8xf32> -> vector<8x32xf32>
    %87 = arith.truncf %86 : vector<8x32xf32> to vector<8x32xbf16>
    %c0_27 = arith.constant 0 : index
    %c0_28 = arith.constant 0 : index
    %c0_29 = arith.constant 0 : index
    %88 = vector.load %arg5[%c0_27, %c0_28, %c0_29] : memref<1x8x32xbf16, #tpu.memory_space<vmem>>, vector<1x8x32xbf16>
    %89 = vector.shape_cast %88 : vector<1x8x32xbf16> to vector<8x32xbf16>
    %90 = vector.shape_cast %87 : vector<8x32xbf16> to vector<1x8x32xbf16>
    tpu.vector_store %arg5[%c0_27, %c0_28, %c0_29], %90 {strides = array<i32>} : memref<1x8x32xbf16, #tpu.memory_space<vmem>>, vector<1x8x32xbf16>,
    return
  }
  func.func @transform_0(%arg0: i32, %arg1: i32) -> (i32, i32, i32) {
    %c0_i32 = arith.constant 0 : i32
    %c0_i32_0 = arith.constant 0 : i32
    return %arg0, %arg1, %c0_i32 : i32, i32, i32
  }
  func.func @transform_1(%arg0: i32, %arg1: i32) -> (i32, i32, i32) {
    %c0_i32 = arith.constant 0 : i32
    %c0_i32_0 = arith.constant 0 : i32
    %c0_i32_1 = arith.constant 0 : i32
    return %arg0, %c0_i32, %c0_i32_0 : i32, i32, i32
  }
  func.func @transform_2(%arg0: i32, %arg1: i32) -> (i32, i32, i32) {
    %c0_i32 = arith.constant 0 : i32
    %c0_i32_0 = arith.constant 0 : i32
    %c0_i32_1 = arith.constant 0 : i32
    return %arg0, %c0_i32, %c0_i32_0 : i32, i32, i32
  }
  func.func @transform_3(%arg0: i32, %arg1: i32) -> (i32, i32, i32) {
    %c0_i32 = arith.constant 0 : i32
    %c0_i32_0 = arith.constant 0 : i32
    return %arg0, %arg1, %c0_i32 : i32, i32, i32
  }
}

module attributes {stable_mosaic.version = 11 : i64} {
  func.func @_dense_res_ln_kernel(%arg0: i32, %arg1: i32, %arg2: memref<16x32xbf16, #tpu.memory_space<vmem>>, %arg3: memref<32x32xbf16, #tpu.memory_space<vmem>>, %arg4: memref<1x32xf32, #tpu.memory_space<vmem>>, %arg5: memref<16x32xbf16, #tpu.memory_space<vmem>>, %arg6: memref<1x32xf32, #tpu.memory_space<vmem>>, %arg7: memref<1x32xf32, #tpu.memory_space<vmem>>, %arg8: memref<16x32xbf16, #tpu.memory_space<vmem>>, %arg9: memref<16x32xf32, #tpu.memory_space<vmem>>) attributes {dimension_semantics = [#tpu.dimension_semantics<parallel>, #tpu.dimension_semantics<arbitrary>], iteration_bounds = array<i64: 1, 1>, scalar_prefetch = 0 : i64, scratch_operands = 1 : i64, tpu.core_type = #tpu.core_type<tc>, window_params = [{transform_indices = @transform_0, window_bounds = array<i64: 16, 32>}, {transform_indices = @transform_1, window_bounds = array<i64: 32, 32>}, {pipeline_mode = #tpu.pipeline_mode<synchronous>, transform_indices = @transform_2, window_bounds = array<i64: 1, 32>}, {transform_indices = @transform_3, window_bounds = array<i64: 16, 32>}, {pipeline_mode = #tpu.pipeline_mode<synchronous>, transform_indices = @transform_4, window_bounds = array<i64: 1, 32>}, {pipeline_mode = #tpu.pipeline_mode<synchronous>, transform_indices = @transform_5, window_bounds = array<i64: 1, 32>}, {transform_indices = @transform_6, window_bounds = array<i64: 16, 32>}]} {
    %c0_i32 = arith.constant 0 : i32
    %0 = arith.cmpi eq, %arg1, %c0_i32 : i32
    %1 = arith.extui %0 : i1 to i32
    %c0_i32_0 = arith.constant 0 : i32
    %2 = arith.cmpi ne, %1, %c0_i32_0 : i32
    scf.if %2 {
      %cst_10 = arith.constant 0.000000e+00 : f32
      %12 = vector.broadcast %cst_10 : f32 to vector<16x32xf32>
      %c0_11 = arith.constant 0 : index
      %c0_12 = arith.constant 0 : index
      %13 = vector.load %arg9[%c0_11, %c0_12] : memref<16x32xf32, #tpu.memory_space<vmem>>, vector<16x32xf32>
      tpu.vector_store %arg9[%c0_11, %c0_12], %12 {strides = array<i32>} : memref<16x32xf32, #tpu.memory_space<vmem>>, vector<16x32xf32>,
    } else {
    }
    %c0 = arith.constant 0 : index
    %c0_1 = arith.constant 0 : index
    %3 = vector.load %arg9[%c0, %c0_1] : memref<16x32xf32, #tpu.memory_space<vmem>>, vector<16x32xf32>
    %c0_2 = arith.constant 0 : index
    %c0_3 = arith.constant 0 : index
    %4 = vector.load %arg2[%c0_2, %c0_3] : memref<16x32xbf16, #tpu.memory_space<vmem>>, vector<16x32xbf16>
    %c0_4 = arith.constant 0 : index
    %c0_5 = arith.constant 0 : index
    %5 = vector.load %arg3[%c0_4, %c0_5] : memref<32x32xbf16, #tpu.memory_space<vmem>>, vector<32x32xbf16>
    %cst = arith.constant dense<0.000000e+00> : vector<16x32xf32>
    %6 = tpu.matmul %4, %5, %cst {dimension_numbers = #tpu.dot_dimension_numbers<[1], [0], [0], [1], [0, 0, 1, 1], [], []>} : vector<16x32xbf16>, vector<32x32xbf16>, vector<16x32xf32> -> vector<16x32xf32>
    %7 = arith.addf %3, %6 : vector<16x32xf32>
    %c0_6 = arith.constant 0 : index
    %c0_7 = arith.constant 0 : index
    %8 = vector.load %arg9[%c0_6, %c0_7] : memref<16x32xf32, #tpu.memory_space<vmem>>, vector<16x32xf32>
    tpu.vector_store %arg9[%c0_6, %c0_7], %7 {strides = array<i32>} : memref<16x32xf32, #tpu.memory_space<vmem>>, vector<16x32xf32>,
    %c0_i32_8 = arith.constant 0 : i32
    %9 = arith.cmpi eq, %arg1, %c0_i32_8 : i32
    %10 = arith.extui %9 : i1 to i32
    %c0_i32_9 = arith.constant 0 : i32
    %11 = arith.cmpi ne, %10, %c0_i32_9 : i32
    scf.if %11 {
      %c0_10 = arith.constant 0 : index
      %c0_11 = arith.constant 0 : index
      %12 = vector.load %arg9[%c0_10, %c0_11] : memref<16x32xf32, #tpu.memory_space<vmem>>, vector<16x32xf32>
      %c0_12 = arith.constant 0 : index
      %c0_13 = arith.constant 0 : index
      %13 = vector.load %arg4[%c0_12, %c0_13] : memref<1x32xf32, #tpu.memory_space<vmem>>, vector<1x32xf32>
      %14 = vector.broadcast %13 : vector<1x32xf32> to vector<16x32xf32>
      %15 = arith.addf %12, %14 : vector<16x32xf32>
      %c0_14 = arith.constant 0 : index
      %c0_15 = arith.constant 0 : index
      %16 = vector.load %arg5[%c0_14, %c0_15] : memref<16x32xbf16, #tpu.memory_space<vmem>>, vector<16x32xbf16>
      %17 = arith.extf %16 : vector<16x32xbf16> to vector<16x32xf32>
      %18 = arith.addf %15, %17 : vector<16x32xf32>
      %cst_16 = arith.constant dense<0.000000e+00> : vector<16xf32>
      %19 = vector.multi_reduction <add>, %18, %cst_16 [1] : vector<16x32xf32> to vector<16xf32>
      %20 = vector.shape_cast %19 : vector<16xf32> to vector<16x1xf32>
      %cst_17 = arith.constant 3.200000e+01 : f32
      %21 = vector.broadcast %cst_17 : f32 to vector<16x1xf32>
      %22 = arith.divf %20, %21 : vector<16x1xf32>
      %23 = vector.broadcast %22 : vector<16x1xf32> to vector<16x32xf32>
      %24 = arith.subf %18, %23 : vector<16x32xf32>
      %25 = arith.mulf %24, %24 : vector<16x32xf32>
      %cst_18 = arith.constant dense<0.000000e+00> : vector<16xf32>
      %26 = vector.multi_reduction <add>, %25, %cst_18 [1] : vector<16x32xf32> to vector<16xf32>
      %27 = vector.shape_cast %26 : vector<16xf32> to vector<16x1xf32>
      %cst_19 = arith.constant 3.200000e+01 : f32
      %28 = vector.broadcast %cst_19 : f32 to vector<16x1xf32>
      %29 = arith.divf %27, %28 : vector<16x1xf32>
      %30 = vector.broadcast %22 : vector<16x1xf32> to vector<16x32xf32>
      %31 = arith.subf %18, %30 : vector<16x32xf32>
      %cst_20 = arith.constant 9.99999996E-13 : f32
      %32 = vector.broadcast %cst_20 : f32 to vector<16x1xf32>
      %33 = arith.addf %29, %32 : vector<16x1xf32>
      %34 = math.rsqrt %33 : vector<16x1xf32>
      %35 = vector.broadcast %34 : vector<16x1xf32> to vector<16x32xf32>
      %36 = arith.mulf %31, %35 : vector<16x32xf32>
      %c0_21 = arith.constant 0 : index
      %c0_22 = arith.constant 0 : index
      %37 = vector.load %arg6[%c0_21, %c0_22] : memref<1x32xf32, #tpu.memory_space<vmem>>, vector<1x32xf32>
      %38 = vector.broadcast %37 : vector<1x32xf32> to vector<16x32xf32>
      %39 = arith.mulf %36, %38 : vector<16x32xf32>
      %c0_23 = arith.constant 0 : index
      %c0_24 = arith.constant 0 : index
      %40 = vector.load %arg7[%c0_23, %c0_24] : memref<1x32xf32, #tpu.memory_space<vmem>>, vector<1x32xf32>
      %41 = vector.broadcast %40 : vector<1x32xf32> to vector<16x32xf32>
      %42 = arith.addf %39, %41 : vector<16x32xf32>
      %43 = arith.truncf %42 : vector<16x32xf32> to vector<16x32xbf16>
      %c0_25 = arith.constant 0 : index
      %c0_26 = arith.constant 0 : index
      %44 = vector.load %arg8[%c0_25, %c0_26] : memref<16x32xbf16, #tpu.memory_space<vmem>>, vector<16x32xbf16>
      tpu.vector_store %arg8[%c0_25, %c0_26], %43 {strides = array<i32>} : memref<16x32xbf16, #tpu.memory_space<vmem>>, vector<16x32xbf16>,
    } else {
    }
    return
  }
  func.func @transform_0(%arg0: i32, %arg1: i32) -> (i32, i32) {
    %c0_i32 = arith.constant 0 : i32
    return %arg0, %arg1 : i32, i32
  }
  func.func @transform_1(%arg0: i32, %arg1: i32) -> (i32, i32) {
    %c0_i32 = arith.constant 0 : i32
    %c0_i32_0 = arith.constant 0 : i32
    return %arg1, %c0_i32 : i32, i32
  }
  func.func @transform_2(%arg0: i32, %arg1: i32) -> (i32, i32) {
    %c0_i32 = arith.constant 0 : i32
    %c0_i32_0 = arith.constant 0 : i32
    %c0_i32_1 = arith.constant 0 : i32
    return %c0_i32, %c0_i32_0 : i32, i32
  }
  func.func @transform_3(%arg0: i32, %arg1: i32) -> (i32, i32) {
    %c0_i32 = arith.constant 0 : i32
    %c0_i32_0 = arith.constant 0 : i32
    return %arg0, %c0_i32 : i32, i32
  }
  func.func @transform_4(%arg0: i32, %arg1: i32) -> (i32, i32) {
    %c0_i32 = arith.constant 0 : i32
    %c0_i32_0 = arith.constant 0 : i32
    %c0_i32_1 = arith.constant 0 : i32
    return %c0_i32, %c0_i32_0 : i32, i32
  }
  func.func @transform_5(%arg0: i32, %arg1: i32) -> (i32, i32) {
    %c0_i32 = arith.constant 0 : i32
    %c0_i32_0 = arith.constant 0 : i32
    %c0_i32_1 = arith.constant 0 : i32
    return %c0_i32, %c0_i32_0 : i32, i32
  }
  func.func @transform_6(%arg0: i32, %arg1: i32) -> (i32, i32) {
    %c0_i32 = arith.constant 0 : i32
    %c0_i32_0 = arith.constant 0 : i32
    return %arg0, %c0_i32 : i32, i32
  }
}

module attributes {stable_mosaic.version = 11 : i64} {
  func.func @_ffn_kernel(%arg0: i32, %arg1: i32, %arg2: memref<16x32xbf16, #tpu.memory_space<vmem>>, %arg3: memref<32x128xbf16, #tpu.memory_space<vmem>>, %arg4: memref<1x128xf32, #tpu.memory_space<vmem>>, %arg5: memref<128x32xbf16, #tpu.memory_space<vmem>>, %arg6: memref<1x32xf32, #tpu.memory_space<vmem>>, %arg7: memref<16x32xbf16, #tpu.memory_space<vmem>>, %arg8: memref<1x32xf32, #tpu.memory_space<vmem>>, %arg9: memref<1x32xf32, #tpu.memory_space<vmem>>, %arg10: memref<16x32xbf16, #tpu.memory_space<vmem>>, %arg11: memref<16x32xf32, #tpu.memory_space<vmem>>) attributes {dimension_semantics = [#tpu.dimension_semantics<parallel>, #tpu.dimension_semantics<arbitrary>], iteration_bounds = array<i64: 1, 1>, scalar_prefetch = 0 : i64, scratch_operands = 1 : i64, tpu.core_type = #tpu.core_type<tc>, window_params = [{transform_indices = @transform_0, window_bounds = array<i64: 16, 32>}, {transform_indices = @transform_1, window_bounds = array<i64: 32, 128>}, {transform_indices = @transform_2, window_bounds = array<i64: 1, 128>}, {transform_indices = @transform_3, window_bounds = array<i64: 128, 32>}, {pipeline_mode = #tpu.pipeline_mode<synchronous>, transform_indices = @transform_4, window_bounds = array<i64: 1, 32>}, {transform_indices = @transform_5, window_bounds = array<i64: 16, 32>}, {pipeline_mode = #tpu.pipeline_mode<synchronous>, transform_indices = @transform_6, window_bounds = array<i64: 1, 32>}, {pipeline_mode = #tpu.pipeline_mode<synchronous>, transform_indices = @transform_7, window_bounds = array<i64: 1, 32>}, {transform_indices = @transform_8, window_bounds = array<i64: 16, 32>}]} {
    %c0_i32 = arith.constant 0 : i32
    %0 = arith.cmpi eq, %arg1, %c0_i32 : i32
    %1 = arith.extui %0 : i1 to i32
    %c0_i32_0 = arith.constant 0 : i32
    %2 = arith.cmpi ne, %1, %c0_i32_0 : i32
    scf.if %2 {
      %cst_18 = arith.constant 0.000000e+00 : f32
      %26 = vector.broadcast %cst_18 : f32 to vector<16x32xf32>
      %c0_19 = arith.constant 0 : index
      %c0_20 = arith.constant 0 : index
      %27 = vector.load %arg11[%c0_19, %c0_20] : memref<16x32xf32, #tpu.memory_space<vmem>>, vector<16x32xf32>
      tpu.vector_store %arg11[%c0_19, %c0_20], %26 {strides = array<i32>} : memref<16x32xf32, #tpu.memory_space<vmem>>, vector<16x32xf32>,
    } else {
    }
    %c0 = arith.constant 0 : index
    %c0_1 = arith.constant 0 : index
    %3 = vector.load %arg2[%c0, %c0_1] : memref<16x32xbf16, #tpu.memory_space<vmem>>, vector<16x32xbf16>
    %c0_2 = arith.constant 0 : index
    %c0_3 = arith.constant 0 : index
    %4 = vector.load %arg3[%c0_2, %c0_3] : memref<32x128xbf16, #tpu.memory_space<vmem>>, vector<32x128xbf16>
    %cst = arith.constant dense<0.000000e+00> : vector<16x128xf32>
    %5 = tpu.matmul %3, %4, %cst {dimension_numbers = #tpu.dot_dimension_numbers<[1], [0], [0], [1], [0, 0, 1, 1], [], []>} : vector<16x32xbf16>, vector<32x128xbf16>, vector<16x128xf32> -> vector<16x128xf32>
    %c0_4 = arith.constant 0 : index
    %c0_5 = arith.constant 0 : index
    %6 = vector.load %arg4[%c0_4, %c0_5] : memref<1x128xf32, #tpu.memory_space<vmem>>, vector<1x128xf32>
    %7 = vector.broadcast %6 : vector<1x128xf32> to vector<16x128xf32>
    %8 = arith.addf %5, %7 : vector<16x128xf32>
    %cst_6 = arith.constant 5.000000e-01 : f32
    %9 = vector.broadcast %cst_6 : f32 to vector<16x128xf32>
    %10 = arith.mulf %9, %8 : vector<16x128xf32>
    %cst_7 = arith.constant 0.707106769 : f32
    %11 = vector.broadcast %cst_7 : f32 to vector<16x128xf32>
    %12 = arith.mulf %8, %11 : vector<16x128xf32>
    %13 = math.erf %12 : vector<16x128xf32>
    %cst_8 = arith.constant 1.000000e+00 : f32
    %14 = vector.broadcast %cst_8 : f32 to vector<16x128xf32>
    %15 = arith.addf %14, %13 : vector<16x128xf32>
    %16 = arith.mulf %10, %15 : vector<16x128xf32>
    %c0_9 = arith.constant 0 : index
    %c0_10 = arith.constant 0 : index
    %17 = vector.load %arg11[%c0_9, %c0_10] : memref<16x32xf32, #tpu.memory_space<vmem>>, vector<16x32xf32>
    %18 = arith.truncf %16 : vector<16x128xf32> to vector<16x128xbf16>
    %c0_11 = arith.constant 0 : index
    %c0_12 = arith.constant 0 : index
    %19 = vector.load %arg5[%c0_11, %c0_12] : memref<128x32xbf16, #tpu.memory_space<vmem>>, vector<128x32xbf16>
    %cst_13 = arith.constant dense<0.000000e+00> : vector<16x32xf32>
    %20 = tpu.matmul %18, %19, %cst_13 {dimension_numbers = #tpu.dot_dimension_numbers<[1], [0], [0], [1], [0, 0, 1, 1], [], []>} : vector<16x128xbf16>, vector<128x32xbf16>, vector<16x32xf32> -> vector<16x32xf32>
    %21 = arith.addf %17, %20 : vector<16x32xf32>
    %c0_14 = arith.constant 0 : index
    %c0_15 = arith.constant 0 : index
    %22 = vector.load %arg11[%c0_14, %c0_15] : memref<16x32xf32, #tpu.memory_space<vmem>>, vector<16x32xf32>
    tpu.vector_store %arg11[%c0_14, %c0_15], %21 {strides = array<i32>} : memref<16x32xf32, #tpu.memory_space<vmem>>, vector<16x32xf32>,
    %c0_i32_16 = arith.constant 0 : i32
    %23 = arith.cmpi eq, %arg1, %c0_i32_16 : i32
    %24 = arith.extui %23 : i1 to i32
    %c0_i32_17 = arith.constant 0 : i32
    %25 = arith.cmpi ne, %24, %c0_i32_17 : i32
    scf.if %25 {
      %c0_18 = arith.constant 0 : index
      %c0_19 = arith.constant 0 : index
      %26 = vector.load %arg11[%c0_18, %c0_19] : memref<16x32xf32, #tpu.memory_space<vmem>>, vector<16x32xf32>
      %c0_20 = arith.constant 0 : index
      %c0_21 = arith.constant 0 : index
      %27 = vector.load %arg6[%c0_20, %c0_21] : memref<1x32xf32, #tpu.memory_space<vmem>>, vector<1x32xf32>
      %28 = vector.broadcast %27 : vector<1x32xf32> to vector<16x32xf32>
      %29 = arith.addf %26, %28 : vector<16x32xf32>
      %c0_22 = arith.constant 0 : index
      %c0_23 = arith.constant 0 : index
      %30 = vector.load %arg7[%c0_22, %c0_23] : memref<16x32xbf16, #tpu.memory_space<vmem>>, vector<16x32xbf16>
      %31 = arith.extf %30 : vector<16x32xbf16> to vector<16x32xf32>
      %32 = arith.addf %29, %31 : vector<16x32xf32>
      %cst_24 = arith.constant dense<0.000000e+00> : vector<16xf32>
      %33 = vector.multi_reduction <add>, %32, %cst_24 [1] : vector<16x32xf32> to vector<16xf32>
      %34 = vector.shape_cast %33 : vector<16xf32> to vector<16x1xf32>
      %cst_25 = arith.constant 3.200000e+01 : f32
      %35 = vector.broadcast %cst_25 : f32 to vector<16x1xf32>
      %36 = arith.divf %34, %35 : vector<16x1xf32>
      %37 = vector.broadcast %36 : vector<16x1xf32> to vector<16x32xf32>
      %38 = arith.subf %32, %37 : vector<16x32xf32>
      %39 = arith.mulf %38, %38 : vector<16x32xf32>
      %cst_26 = arith.constant dense<0.000000e+00> : vector<16xf32>
      %40 = vector.multi_reduction <add>, %39, %cst_26 [1] : vector<16x32xf32> to vector<16xf32>
      %41 = vector.shape_cast %40 : vector<16xf32> to vector<16x1xf32>
      %cst_27 = arith.constant 3.200000e+01 : f32
      %42 = vector.broadcast %cst_27 : f32 to vector<16x1xf32>
      %43 = arith.divf %41, %42 : vector<16x1xf32>
      %44 = vector.broadcast %36 : vector<16x1xf32> to vector<16x32xf32>
      %45 = arith.subf %32, %44 : vector<16x32xf32>
      %cst_28 = arith.constant 9.99999996E-13 : f32
      %46 = vector.broadcast %cst_28 : f32 to vector<16x1xf32>
      %47 = arith.addf %43, %46 : vector<16x1xf32>
      %48 = math.rsqrt %47 : vector<16x1xf32>
      %49 = vector.broadcast %48 : vector<16x1xf32> to vector<16x32xf32>
      %50 = arith.mulf %45, %49 : vector<16x32xf32>
      %c0_29 = arith.constant 0 : index
      %c0_30 = arith.constant 0 : index
      %51 = vector.load %arg8[%c0_29, %c0_30] : memref<1x32xf32, #tpu.memory_space<vmem>>, vector<1x32xf32>
      %52 = vector.broadcast %51 : vector<1x32xf32> to vector<16x32xf32>
      %53 = arith.mulf %50, %52 : vector<16x32xf32>
      %c0_31 = arith.constant 0 : index
      %c0_32 = arith.constant 0 : index
      %54 = vector.load %arg9[%c0_31, %c0_32] : memref<1x32xf32, #tpu.memory_space<vmem>>, vector<1x32xf32>
      %55 = vector.broadcast %54 : vector<1x32xf32> to vector<16x32xf32>
      %56 = arith.addf %53, %55 : vector<16x32xf32>
      %57 = arith.truncf %56 : vector<16x32xf32> to vector<16x32xbf16>
      %c0_33 = arith.constant 0 : index
      %c0_34 = arith.constant 0 : index
      %58 = vector.load %arg10[%c0_33, %c0_34] : memref<16x32xbf16, #tpu.memory_space<vmem>>, vector<16x32xbf16>
      tpu.vector_store %arg10[%c0_33, %c0_34], %57 {strides = array<i32>} : memref<16x32xbf16, #tpu.memory_space<vmem>>, vector<16x32xbf16>,
    } else {
    }
    return
  }
  func.func @transform_0(%arg0: i32, %arg1: i32) -> (i32, i32) {
    %c0_i32 = arith.constant 0 : i32
    %c0_i32_0 = arith.constant 0 : i32
    return %arg0, %c0_i32 : i32, i32
  }
  func.func @transform_1(%arg0: i32, %arg1: i32) -> (i32, i32) {
    %c0_i32 = arith.constant 0 : i32
    %c0_i32_0 = arith.constant 0 : i32
    return %c0_i32, %arg1 : i32, i32
  }
  func.func @transform_2(%arg0: i32, %arg1: i32) -> (i32, i32) {
    %c0_i32 = arith.constant 0 : i32
    %c0_i32_0 = arith.constant 0 : i32
    return %c0_i32, %arg1 : i32, i32
  }
  func.func @transform_3(%arg0: i32, %arg1: i32) -> (i32, i32) {
    %c0_i32 = arith.constant 0 : i32
    %c0_i32_0 = arith.constant 0 : i32
    return %arg1, %c0_i32 : i32, i32
  }
  func.func @transform_4(%arg0: i32, %arg1: i32) -> (i32, i32) {
    %c0_i32 = arith.constant 0 : i32
    %c0_i32_0 = arith.constant 0 : i32
    %c0_i32_1 = arith.constant 0 : i32
    return %c0_i32, %c0_i32_0 : i32, i32
  }
  func.func @transform_5(%arg0: i32, %arg1: i32) -> (i32, i32) {
    %c0_i32 = arith.constant 0 : i32
    %c0_i32_0 = arith.constant 0 : i32
    return %arg0, %c0_i32 : i32, i32
  }
  func.func @transform_6(%arg0: i32, %arg1: i32) -> (i32, i32) {
    %c0_i32 = arith.constant 0 : i32
    %c0_i32_0 = arith.constant 0 : i32
    %c0_i32_1 = arith.constant 0 : i32
    return %c0_i32, %c0_i32_0 : i32, i32
  }
  func.func @transform_7(%arg0: i32, %arg1: i32) -> (i32, i32) {
    %c0_i32 = arith.constant 0 : i32
    %c0_i32_0 = arith.constant 0 : i32
    %c0_i32_1 = arith.constant 0 : i32
    return %c0_i32, %c0_i32_0 : i32, i32
  }
  func.func @transform_8(%arg0: i32, %arg1: i32) -> (i32, i32) {
    %c0_i32 = arith.constant 0 : i32
    %c0_i32_0 = arith.constant 0 : i32
    return %arg0, %c0_i32 : i32, i32
  }
}

</mosaic_0001>

<llo_original>
// kernel: bert_encoder_forward.10
$region0: #{bert_encoder_forward.10}
  #allocation0 [shape = 'u32[]', space=smem, size = 0x4, offset = 0x4, fixed_abs, tag = 'smem constant byte address 0x4 - core index']
  #allocation1 [shape = 'u32[144,128]{1,0:T(1,128)}', space=vmem, size = 0x12000, scoped, tag = 'internal scratch']
  #allocation2 [shape = 'f32[16,32]{1,0:T(8,128)}', space=vmem, size = 0x2000, scoped, tag = 'scratch operand']
  %s0 = inlined_call_operand.vmem [shape: bf16[16,32], index: 0, kind: input, shape index: {}]
  %s1 = inlined_call_operand.vmem [shape: bf16[32,32], index: 1, kind: input, shape index: {}]
  %s2 = inlined_call_operand.vmem [shape: f32[1,32], index: 2, kind: input, shape index: {}]
  %s3 = inlined_call_operand.vmem [shape: bf16[16,32], index: 3, kind: input, shape index: {}]
  %s4 = inlined_call_operand.vmem [shape: f32[1,32], index: 4, kind: input, shape index: {}]
  %s5 = inlined_call_operand.vmem [shape: f32[1,32], index: 5, kind: input, shape index: {}]
  %s6 = inlined_call_operand.vmem [shape: bf16[16,32], index: 6, kind: output, shape index: {}]
  %s7 = sld [smem:[#allocation0]]
  $region42: #{bert_encoder_forward.10} parent=0
    _
  %s9 = ssub.s32 1, %s7
  %s10 = scalar_select 0, %s9, %s7
  // Predicated region
  $region2: #{bert_encoder_forward.10} parent=0 // pred_check
    _
  $region3: #{bert_encoder_forward.10} parent=0 // pred_check_branch
    %12 = sbr.rel (0) target = $region5
  $region4: #{bert_encoder_forward.10} parent=0 // pred_region
    _
  $region5: #{bert_encoder_forward.10} parent=0 // pred_fallthru
    _
  // Predicated region
  $region6: #{bert_encoder_forward.10} parent=0 // pred_check
    _
  $region7: #{bert_encoder_forward.10} parent=0 // pred_check_branch
    %14 = sbr.rel (0) target = $region9
  $region8: #{bert_encoder_forward.10} parent=0 // pred_region
    _
  $region9: #{bert_encoder_forward.10} parent=0 // pred_fallthru
    _
  // Predicated region
  $region10: #{bert_encoder_forward.10} parent=0 // pred_check
    _
  $region11: #{bert_encoder_forward.10} parent=0 // pred_check_branch
    %16 = sbr.rel (0) target = $region13
  $region12: #{bert_encoder_forward.10} parent=0 // pred_region
    _
  $region13: #{bert_encoder_forward.10} parent=0 // pred_fallthru
    _
  // Predicated region
  $region14: #{bert_encoder_forward.10} parent=0 // pred_check
    _
  $region15: #{bert_encoder_forward.10} parent=0 // pred_check_branch
    %18 = sbr.rel (0) target = $region17
  $region16: #{bert_encoder_forward.10} parent=0 // pred_region
    _
  $region17: #{bert_encoder_forward.10} parent=0 // pred_fallthru
    _
  // Predicated region
  $region18: #{bert_encoder_forward.10} parent=0 // pred_check
    _
  $region19: #{bert_encoder_forward.10} parent=0 // pred_check_branch
    %20 = sbr.rel (0) target = $region21
  $region20: #{bert_encoder_forward.10} parent=0 // pred_region
    _
  $region21: #{bert_encoder_forward.10} parent=0 // pred_fallthru
    _
  // Predicated region
  $region22: #{bert_encoder_forward.10} parent=0 // pred_check
    _
  $region23: #{bert_encoder_forward.10} parent=0 // pred_check_branch
    %22 = sbr.rel (0) target = $region25
  $region24: #{bert_encoder_forward.10} parent=0 // pred_region
    _
  $region25: #{bert_encoder_forward.10} parent=0 // pred_fallthru
    _
  %p24 = scmp.eq.s32.totalorder 0, 0
  // Predicated region
  $region26: #{bert_encoder_forward.10} parent=0 // pred_check
    %p25 = pneg %p24
  $region27: #{bert_encoder_forward.10} parent=0 // pred_check_branch
    %27 = sbr.rel (%p25) target = $region29
  $region28: #{bert_encoder_forward.10} parent=0 // pred_region
    %vm28 = vcmask 261120
    %29 = vst.msk [vmem:[#allocation2] sm:$0xff] %vm28, 0.0
    %30 = vst.msk [vmem:[#allocation2 + $0x8] sm:$0xff] %vm28, 0.0
  $region29: #{bert_encoder_forward.10} parent=0 // pred_fallthru
    _
  %v31 = vld [vmem:[#allocation2] sm:$0xff]
  %v32 = vld [vmem:[#allocation2 + $0x8] sm:$0xff]
  %v33 = vld [vmem:[%s0] sm:$0xf]
  %v34 = vld [vmem:[%s0 + $0x4] sm:$0xf]
  %v35 = vld [vmem:[%s1] sm:$0xf]
  %v36 = vld [vmem:[%s1 + $0x4] sm:$0xf]
  %v37 = vld [vmem:[%s1 + $0x8] sm:$0xf]
  %v38 = vld [vmem:[%s1 + $0xc] sm:$0xf]
  %v41 = vunpack.c.l.b16 %v33
  %v42 = vunpack.c.l.b16 %v34
  %v43 = vpack.c.b16 %v42, %v41
  %v48 = vunpack.c.l.b16 %v35
  %v49 = vunpack.c.l.b16 %v36
  %v50 = vunpack.c.l.b16 %v37
  %v51 = vunpack.c.l.b16 %v38
  %v52 = vpack.c.b16 %v49, %v48
  %v53 = vpack.c.b16 %v51, %v50
  %vm56 = vcmask 261120
  %v58 = vsel %vm56, %v43, 0
  %60 = vmatprep.subr.bf16.mxu0 0
  %61 = vmatpush1.bf16.msra.mxu0 %v52
  %62 = vmatprep.subr.bf16.mxu0 0
  %63 = vmatpush1.bf16.msra.mxu0 %v53
  %64 = vmatprep.subr.bf16.mxu0 0
  %65 = vmatpush1.bf16.msra.mxu0 0
  %66 = vmatprep.subr.bf16.mxu0 0
  %67 = vmatpush1.bf16.msra.mxu0 0
  %68 = vmatprep.subr.bf16.mxu0 0
  %69 = vmatpush1.bf16.msra.mxu0 0
  %70 = vmatprep.subr.bf16.mxu0 0
  %71 = vmatpush1.bf16.msra.mxu0 0
  %72 = vmatprep.subr.bf16.mxu0 0
  %73 = vmatpush1.bf16.msra.mxu0 0
  %74 = vmatprep.subr.bf16.mxu0 0
  %75 = vmatpush1.bf16.msra.mxu0 0
  %76 = vmatprep.subr.bf16.mxu0 0
  %77 = vmatpush1.bf16.msra.mxu0 0
  %78 = vmatprep.subr.bf16.mxu0 0
  %79 = vmatpush1.bf16.msra.mxu0 0
  %80 = vmatprep.subr.bf16.mxu0 0
  %81 = vmatpush1.bf16.msra.mxu0 0
  %82 = vmatprep.subr.bf16.mxu0 0
  %83 = vmatpush1.bf16.msra.mxu0 0
  %84 = vmatprep.subr.bf16.mxu0 0
  %85 = vmatpush1.bf16.msra.mxu0 0
  %86 = vmatprep.subr.bf16.mxu0 0
  %87 = vmatpush1.bf16.msra.mxu0 0
  %88 = vmatprep.subr.bf16.mxu0 0
  %89 = vmatpush1.bf16.msra.mxu0 0
  %90 = vmatprep.subr.bf16.mxu0 0
  %91 = vmatpush1.bf16.msra.mxu0 0
  %92 = vmatprep.mubr.bf16.mxu0 0
  %93 = vmatmul.mubr.bf16.gmra.mrb[0].mxu0 %v58
  %v94 = vpop.f32.mrb[0].mxu0
  %v95 = vadd.f32 0.0, %v94
  %v96 = vpop.f32.mrb[0].mxu0
  %v97 = vpop.f32.mrb[0].mxu0
  %v98 = vadd.f32 0.0, %v97
  %v99 = vpop.f32.mrb[0].mxu0
  %100 = vdwg.mxu0
  %v101 = vadd.f32 %v31, %v95
  %v102 = vadd.f32 %v32, %v98
  %103 = vst.msk [vmem:[#allocation2] sm:$0xff] %vm56, %v101
  %104 = vst.msk [vmem:[#allocation2 + $0x8] sm:$0xff] %vm56, %v102
  // Predicated region
  $region30: #{bert_encoder_forward.10} parent=0 // pred_check
    %p105 = pneg %p24
  $region31: #{bert_encoder_forward.10} parent=0 // pred_check_branch
    %107 = sbr.rel (%p105) target = $region33
  $region32: #{bert_encoder_forward.10} parent=0 // pred_region
    %v108 = vld [vmem:[#allocation2] sm:$0xff]
    %v109 = vld [vmem:[#allocation2 + $0x8] sm:$0xff]
    %v110 = vld [vmem:[%s2] sm:$0x1]
    %v112 = vlaneseq
    %v113 = vshrl.u32 %v112, 7
    %v114 = vsub.s32 0, %v113
    %v115 = vrot.slane %v110, %v114
    %v117 = vadd.f32 %v108, %v115
    %v118 = vadd.f32 %v109, %v115
    %v119 = vld [vmem:[%s3] sm:$0xf]
    %v120 = vld [vmem:[%s3 + $0x4] sm:$0xf]
    %v121 = vunpack.c.l.bf16 %v119
    %v122 = vunpack.c.l.bf16 %v120
    %v123 = vadd.f32 %v117, %v121
    %v124 = vadd.f32 %v118, %v122
    %v125 = vsel %vm56, %v123, 0.0
    %126 = vadd.xlane.f32.xlu0 %v125
    %v127 = vpop.xlane.xlu0 %126
    %v128 = vsel %vm56, %v124, 0.0
    %129 = vadd.xlane.f32.xlu0 %v128
    %v130 = vpop.xlane.xlu0 %129
    %v131 = vrcp.pop 32.0
    %v132 = vmul.f32 %v127, %v131
    %v133 = vmul.f32 %v130, %v131
    %v134 = vsub.f32 %v123, %v132
    %v135 = vsub.f32 %v124, %v133
    %v136 = vmul.f32 %v134, %v134
    %v137 = vmul.f32 %v135, %v135
    %v138 = vsel %vm56, %v136, 0.0
    %139 = vadd.xlane.f32.xlu0 %v138
    %v140 = vpop.xlane.xlu0 %139
    %v141 = vsel %vm56, %v137, 0.0
    %142 = vadd.xlane.f32.xlu0 %v141
    %v143 = vpop.xlane.xlu0 %142
    %v144 = vmul.f32 %v140, %v131
    %v145 = vmul.f32 %v143, %v131
    %v146 = vadd.f32 %v144, 1e-12
    %v147 = vadd.f32 %v145, 1e-12
    %v148 = vrsqrt.pop %v146
    %v149 = vrsqrt.pop %v147
    %v150 = vmul.f32 %v134, %v148
    %v151 = vmul.f32 %v135, %v149
    %v152 = vld [vmem:[%s4] sm:$0x1]
    %v154 = vlaneseq
    %v155 = vshrl.u32 %v154, 7
    %v156 = vsub.s32 0, %v155
    %v157 = vrot.slane %v152, %v156
    %v159 = vmul.f32 %v150, %v157
    %v160 = vmul.f32 %v151, %v157
    %v161 = vld [vmem:[%s5] sm:$0x1]
    %v163 = vlaneseq
    %v164 = vshrl.u32 %v163, 7
    %v165 = vsub.s32 0, %v164
    %v166 = vrot.slane %v161, %v165
    %v168 = vadd.f32 %v159, %v166
    %v169 = vadd.f32 %v160, %v166
    %v170 = vpack.c.bf16 %v169, %v168
    %v172 = vunpack.c.l.b16 %v170
    %v173 = vunpack.c.h.b16 %v170
    %v174 = vpack.c.b16 %v172, %v172
    %v175 = vpack.c.b16 %v173, %v173
    %vm178 = vcmask 257024
    %179 = vst.msk [vmem:[%s6] sm:$0xf] %vm178, %v174
    %180 = vst.msk [vmem:[%s6 + $0x4] sm:$0xf] %vm178, %v175
  $region33: #{bert_encoder_forward.10} parent=0 // pred_fallthru
    _
  // Predicated region
  $region34: #{bert_encoder_forward.10} parent=0 // pred_check
    _
  $region35: #{bert_encoder_forward.10} parent=0 // pred_check_branch
    %182 = sbr.rel (0) target = $region37
  $region36: #{bert_encoder_forward.10} parent=0 // pred_region
    _
  $region37: #{bert_encoder_forward.10} parent=0 // pred_fallthru
    _
  // Predicated region
  $region38: #{bert_encoder_forward.10} parent=0 // pred_check
    _
  $region39: #{bert_encoder_forward.10} parent=0 // pred_check_branch
    %184 = sbr.rel (0) target = $region41
  $region40: #{bert_encoder_forward.10} parent=0 // pred_region
    _
  $region41: #{bert_encoder_forward.10} parent=0 // pred_fallthru
    _

// kernel: bert_encoder_forward.8
$region0: #{bert_encoder_forward.8}
  #allocation0 [shape = 'u32[]', space=smem, size = 0x4, offset = 0x4, fixed_abs, tag = 'smem constant byte address 0x4 - core index']
  #allocation1 [shape = 'u32[144,128]{1,0:T(1,128)}', space=vmem, size = 0x12000, scoped, tag = 'internal scratch']
  #allocation2 [shape = 'f32[16,96]{1,0:T(8,128)}', space=vmem, size = 0x2000, scoped, tag = 'scratch operand']
  %s0 = inlined_call_operand.vmem [shape: bf16[16,32], index: 0, kind: input, shape index: {}]
  %s1 = inlined_call_operand.vmem [shape: bf16[32,96], index: 1, kind: input, shape index: {}]
  %s2 = inlined_call_operand.vmem [shape: f32[1,96], index: 2, kind: input, shape index: {}]
  %s3 = inlined_call_operand.vmem [shape: bf16[16,96], index: 3, kind: output, shape index: {}]
  %s4 = sld [smem:[#allocation0]]
  $region30: #{bert_encoder_forward.8} parent=0
    _
  %s6 = ssub.s32 1, %s4
  %s7 = scalar_select 0, %s6, %s4
  // Predicated region
  $region2: #{bert_encoder_forward.8} parent=0 // pred_check
    _
  $region3: #{bert_encoder_forward.8} parent=0 // pred_check_branch
    %9 = sbr.rel (0) target = $region5
  $region4: #{bert_encoder_forward.8} parent=0 // pred_region
    _
  $region5: #{bert_encoder_forward.8} parent=0 // pred_fallthru
    _
  // Predicated region
  $region6: #{bert_encoder_forward.8} parent=0 // pred_check
    _
  $region7: #{bert_encoder_forward.8} parent=0 // pred_check_branch
    %11 = sbr.rel (0) target = $region9
  $region8: #{bert_encoder_forward.8} parent=0 // pred_region
    _
  $region9: #{bert_encoder_forward.8} parent=0 // pred_fallthru
    _
  // Predicated region
  $region10: #{bert_encoder_forward.8} parent=0 // pred_check
    _
  $region11: #{bert_encoder_forward.8} parent=0 // pred_check_branch
    %13 = sbr.rel (0) target = $region13
  $region12: #{bert_encoder_forward.8} parent=0 // pred_region
    _
  $region13: #{bert_encoder_forward.8} parent=0 // pred_fallthru
    _
  %p15 = scmp.eq.s32.totalorder 0, 0
  // Predicated region
  $region14: #{bert_encoder_forward.8} parent=0 // pred_check
    %p16 = pneg %p15
  $region15: #{bert_encoder_forward.8} parent=0 // pred_check_branch
    %18 = sbr.rel (%p16) target = $region17
  $region16: #{bert_encoder_forward.8} parent=0 // pred_region
    %vm19 = vcmask 785408
    %20 = vst.msk [vmem:[#allocation2] sm:$0xff] %vm19, 0.0
    %21 = vst.msk [vmem:[#allocation2 + $0x8] sm:$0xff] %vm19, 0.0
  $region17: #{bert_encoder_forward.8} parent=0 // pred_fallthru
    _
  %v22 = vld [vmem:[#allocation2] sm:$0xff]
  %v23 = vld [vmem:[#allocation2 + $0x8] sm:$0xff]
  %v24 = vld [vmem:[%s0] sm:$0xf]
  %v25 = vld [vmem:[%s0 + $0x4] sm:$0xf]
  %v26 = vld [vmem:[%s1] sm:$0xf]
  %v27 = vld [vmem:[%s1 + $0x4] sm:$0xf]
  %v28 = vld [vmem:[%s1 + $0x8] sm:$0xf]
  %v29 = vld [vmem:[%s1 + $0xc] sm:$0xf]
  %v32 = vunpack.c.l.b16 %v24
  %v33 = vunpack.c.l.b16 %v25
  %v34 = vpack.c.b16 %v33, %v32
  %v39 = vunpack.c.l.b16 %v26
  %v40 = vunpack.c.l.b16 %v27
  %v41 = vunpack.c.l.b16 %v28
  %v42 = vunpack.c.l.b16 %v29
  %v43 = vpack.c.b16 %v40, %v39
  %v44 = vpack.c.b16 %v42, %v41
  %vm47 = vcmask 261120
  %v49 = vsel %vm47, %v34, 0
  %51 = vmatprep.subr.bf16.mxu0 0
  %52 = vmatpush1.bf16.msra.mxu0 %v43
  %53 = vmatprep.subr.bf16.mxu0 0
  %54 = vmatpush1.bf16.msra.mxu0 %v44
  %55 = vmatprep.subr.bf16.mxu0 0
  %56 = vmatpush1.bf16.msra.mxu0 0
  %57 = vmatprep.subr.bf16.mxu0 0
  %58 = vmatpush1.bf16.msra.mxu0 0
  %59 = vmatprep.subr.bf16.mxu0 0
  %60 = vmatpush1.bf16.msra.mxu0 0
  %61 = vmatprep.subr.bf16.mxu0 0
  %62 = vmatpush1.bf16.msra.mxu0 0
  %63 = vmatprep.subr.bf16.mxu0 0
  %64 = vmatpush1.bf16.msra.mxu0 0
  %65 = vmatprep.subr.bf16.mxu0 0
  %66 = vmatpush1.bf16.msra.mxu0 0
  %67 = vmatprep.subr.bf16.mxu0 0
  %68 = vmatpush1.bf16.msra.mxu0 0
  %69 = vmatprep.subr.bf16.mxu0 0
  %70 = vmatpush1.bf16.msra.mxu0 0
  %71 = vmatprep.subr.bf16.mxu0 0
  %72 = vmatpush1.bf16.msra.mxu0 0
  %73 = vmatprep.subr.bf16.mxu0 0
  %74 = vmatpush1.bf16.msra.mxu0 0
  %75 = vmatprep.subr.bf16.mxu0 0
  %76 = vmatpush1.bf16.msra.mxu0 0
  %77 = vmatprep.subr.bf16.mxu0 0
  %78 = vmatpush1.bf16.msra.mxu0 0
  %79 = vmatprep.subr.bf16.mxu0 0
  %80 = vmatpush1.bf16.msra.mxu0 0
  %81 = vmatprep.subr.bf16.mxu0 0
  %82 = vmatpush1.bf16.msra.mxu0 0
  %83 = vmatprep.mubr.bf16.mxu0 0
  %84 = vmatmul.mubr.bf16.gmra.mrb[0].mxu0 %v49
  %v85 = vpop.f32.mrb[0].mxu0
  %v86 = vadd.f32 0.0, %v85
  %v87 = vpop.f32.mrb[0].mxu0
  %v88 = vpop.f32.mrb[0].mxu0
  %v89 = vadd.f32 0.0, %v88
  %v90 = vpop.f32.mrb[0].mxu0
  %91 = vdwg.mxu0
  %v92 = vadd.f32 %v22, %v86
  %v93 = vadd.f32 %v23, %v89
  %vm94 = vcmask 785408
  %95 = vst.msk [vmem:[#allocation2] sm:$0xff] %vm94, %v92
  %96 = vst.msk [vmem:[#allocation2 + $0x8] sm:$0xff] %vm94, %v93
  // Predicated region
  $region18: #{bert_encoder_forward.8} parent=0 // pred_check
    %p97 = pneg %p15
  $region19: #{bert_encoder_forward.8} parent=0 // pred_check_branch
    %99 = sbr.rel (%p97) target = $region21
  $region20: #{bert_encoder_forward.8} parent=0 // pred_region
    %v100 = vld [vmem:[#allocation2] sm:$0xff]
    %v101 = vld [vmem:[#allocation2 + $0x8] sm:$0xff]
    %v102 = vld [vmem:[%s2] sm:$0x1]
    %v104 = vlaneseq
    %v105 = vshrl.u32 %v104, 7
    %v106 = vsub.s32 0, %v105
    %v107 = vrot.slane %v102, %v106
    %v109 = vadd.f32 %v100, %v107
    %v110 = vadd.f32 %v101, %v107
    %v111 = vpack.c.bf16 %v110, %v109
    %v113 = vunpack.c.l.b16 %v111
    %v114 = vunpack.c.h.b16 %v111
    %v115 = vpack.c.b16 %v113, %v113
    %v116 = vpack.c.b16 %v114, %v114
    %vm119 = vcmask 781312
    %120 = vst.msk [vmem:[%s3] sm:$0xf] %vm119, %v115
    %121 = vst.msk [vmem:[%s3 + $0x4] sm:$0xf] %vm119, %v116
  $region21: #{bert_encoder_forward.8} parent=0 // pred_fallthru
    _
  // Predicated region
  $region22: #{bert_encoder_forward.8} parent=0 // pred_check
    _
  $region23: #{bert_encoder_forward.8} parent=0 // pred_check_branch
    %123 = sbr.rel (0) target = $region25
  $region24: #{bert_encoder_forward.8} parent=0 // pred_region
    _
  $region25: #{bert_encoder_forward.8} parent=0 // pred_fallthru
    _
  // Predicated region
  $region26: #{bert_encoder_forward.8} parent=0 // pred_check
    _
  $region27: #{bert_encoder_forward.8} parent=0 // pred_check_branch
    %125 = sbr.rel (0) target = $region29
  $region28: #{bert_encoder_forward.8} parent=0 // pred_region
    _
  $region29: #{bert_encoder_forward.8} parent=0 // pred_fallthru
    _

// kernel: bert_encoder_forward.9
$region0: #{bert_encoder_forward.9}
  #allocation0 [shape = 'u32[]', space=smem, size = 0x4, offset = 0x4, fixed_abs, tag = 'smem constant byte address 0x4 - core index']
  #allocation1 [shape = 'u32[144,128]{1,0:T(1,128)}', space=vmem, size = 0x12000, scoped, tag = 'internal scratch']
  %s0 = inlined_call_operand.vmem [shape: bf16[2,8,96], index: 0, kind: input, shape index: {}, may-alias: {0,1}]
  %s1 = inlined_call_operand.vmem [shape: bf16[2,8,96], index: 1, kind: input, shape index: {}, may-alias: {0,1}]
  %s2 = inlined_call_operand.vmem [shape: f32[2,1,8], index: 2, kind: input, shape index: {}]
  %s3 = inlined_call_operand.vmem [shape: bf16[2,8,32], index: 3, kind: output, shape index: {}]
  %s4 = sld [smem:[#allocation0]]
  $region45: #{bert_encoder_forward.9} parent=0
    _
  %s6 = ssub.s32 1, %s4
  %s7 = scalar_select 0, %s6, %s4
  loop: start=0, step=1, limit=4
  $region2: #{bert_encoder_forward.9} parent=0 // loop_pre_header
    _
  $region3: #{bert_encoder_forward.9} parent=0 // loop_header
    %s9 = sphi 0, %s13
    %p10 = scmp.ge.s32.totalorder %s9, 4
    %s16 = sphi 0, %s28
    %s17 = sphi 0, %s24
    %s18 = sphi 0, %s16
    %s19 = sphi 0, %s17
    %s20 = sphi 0, %s18
    %s21 = sphi 0, %s19
    %s33 = sphi 0, %s35
    %s36 = sphi 0, %s33
    %s37 = sphi 0, %s36
    %s53 = sphi 0, %s37
    %s59 = sphi 0, %s61
    %s62 = sphi 0, %s59
    %s63 = sphi 0, %s62
    %s79 = sphi 0, %s63
    %s85 = sphi 0, %s87
    %s88 = sphi 0, %s85
    %s89 = sphi 0, %s88
    %s105 = sphi 0, %s89
    %s113 = sphi 0, %s115
    %s116 = sphi 0, %s113
    %s117 = sphi 0, %s116
    %s133 = sphi 0, %s117
  $region4: #{bert_encoder_forward.9} parent=0 // loop_header_branch
    %12 = sbr.rel (%p10) target = $region8
  $region5: #{bert_encoder_forward.9} parent=0 // loop_body
    %s14 = ssub.s32 %s9, 1
    %s15 = ssub.s32 %s9, 2
    %s22 = sadd.s32 1, %s17
    %p23 = scmp.ge.s32.totalorder %s22, 1
    %s24 = scalar_select %p23, 0, %s22
    %s25 = sadd.s32 1, %s16
    %s26 = scalar_select %p23, %s25, %s16
    %p27 = scmp.ge.s32.totalorder %s26, 2
    %s28 = scalar_select %p27, 0, %s26
    %s29 = ssub.s32 %s16, %s28
    %s30 = ssub.s32 %s17, %s24
    %s31 = sor.u32 %s29, %s30
    %p32 = scmp.eq.s32.totalorder %s31, 0
    %s34 = sadd.s32 %s33, 1
    %s35 = scalar_select %p32, %s33, %s34
    %p38 = pneg %p32
    %p39 = scmp.eq.s32.totalorder %s9, 1
    %p40 = por %p38, %p39
    %p41 = scmp.ne.s32.totalorder %s33, %s36
    %p42 = scmp.eq.s32.totalorder %s9, 0
    %p43 = por %p41, %p42
    %p44 = scmp.ne.s32.totalorder %s33, %s36
    %p45 = scmp.eq.s32.totalorder %s14, 1
    %p46 = por %p44, %p45
    %p47 = scmp.ne.s32.totalorder %s36, %s37
    %p48 = scmp.eq.s32.totalorder %s14, 0
    %p49 = por %p47, %p48
    %p50 = scmp.ne.s32.totalorder %s36, %s37
    %p51 = scmp.eq.s32.totalorder %s15, 1
    %p52 = por %p50, %p51
    %p54 = scmp.ne.s32.totalorder %s37, %s53
    %p55 = scmp.eq.s32.totalorder %s15, 0
    %p56 = por %p54, %p55
    %s57 = ssub.s32 %s16, %s28
    %p58 = scmp.eq.s32.totalorder %s57, 0
    %s60 = sadd.s32 %s59, 1
    %s61 = scalar_select %p58, %s59, %s60
    %p64 = pneg %p58
    %p65 = scmp.eq.s32.totalorder %s9, 1
    %p66 = por %p64, %p65
    %p67 = scmp.ne.s32.totalorder %s59, %s62
    %p68 = scmp.eq.s32.totalorder %s9, 0
    %p69 = por %p67, %p68
    %p70 = scmp.ne.s32.totalorder %s59, %s62
    %p71 = scmp.eq.s32.totalorder %s14, 1
    %p72 = por %p70, %p71
    %p73 = scmp.ne.s32.totalorder %s62, %s63
    %p74 = scmp.eq.s32.totalorder %s14, 0
    %p75 = por %p73, %p74
    %p76 = scmp.ne.s32.totalorder %s62, %s63
    %p77 = scmp.eq.s32.totalorder %s15, 1
    %p78 = por %p76, %p77
    %p80 = scmp.ne.s32.totalorder %s63, %s79
    %p81 = scmp.eq.s32.totalorder %s15, 0
    %p82 = por %p80, %p81
    %s83 = ssub.s32 %s16, %s28
    %p84 = scmp.eq.s32.totalorder %s83, 0
    %s86 = sadd.s32 %s85, 1
    %s87 = scalar_select %p84, %s85, %s86
    %p90 = pneg %p84
    %p91 = scmp.eq.s32.totalorder %s9, 1
    %p92 = por %p90, %p91
    %p93 = scmp.ne.s32.totalorder %s85, %s88
    %p94 = scmp.eq.s32.totalorder %s9, 0
    %p95 = por %p93, %p94
    %p96 = scmp.ne.s32.totalorder %s85, %s88
    %p97 = scmp.eq.s32.totalorder %s14, 1
    %p98 = por %p96, %p97
    %p99 = scmp.ne.s32.totalorder %s88, %s89
    %p100 = scmp.eq.s32.totalorder %s14, 0
    %p101 = por %p99, %p100
    %p102 = scmp.ne.s32.totalorder %s88, %s89
    %p103 = scmp.eq.s32.totalorder %s15, 1
    %p104 = por %p102, %p103
    %p106 = scmp.ne.s32.totalorder %s89, %s105
    %p107 = scmp.eq.s32.totalorder %s15, 0
    %p108 = por %p106, %p107
    %s109 = ssub.s32 %s16, %s28
    %s110 = ssub.s32 %s17, %s24
    %s111 = sor.u32 %s109, %s110
    %p112 = scmp.eq.s32.totalorder %s111, 0
    %s114 = sadd.s32 %s113, 1
    %s115 = scalar_select %p112, %s113, %s114
    %p118 = pneg %p112
    %p119 = scmp.eq.s32.totalorder %s9, 1
    %p120 = por %p118, %p119
    %p121 = scmp.ne.s32.totalorder %s113, %s116
    %p122 = scmp.eq.s32.totalorder %s9, 0
    %p123 = por %p121, %p122
    %p124 = scmp.ne.s32.totalorder %s113, %s116
    %p125 = scmp.eq.s32.totalorder %s14, 1
    %p126 = por %p124, %p125
    %p127 = scmp.ne.s32.totalorder %s116, %s117
    %p128 = scmp.eq.s32.totalorder %s14, 0
    %p129 = por %p127, %p128
    %p130 = scmp.ne.s32.totalorder %s116, %s117
    %p131 = scmp.eq.s32.totalorder %s15, 1
    %p132 = por %p130, %p131
    %p134 = scmp.ne.s32.totalorder %s117, %s133
    %p135 = scmp.eq.s32.totalorder %s15, 0
    %p136 = por %p134, %p135
    %p137 = scmp.le.s32.totalorder 1, %s9
    %p138 = scmp.lt.s32.totalorder %s9, 3
    %p139 = pnand %p137, %p138
    %p140 = pneg %p139
    // Predicated region
    $region9: #{bert_encoder_forward.9} parent=5 // pred_check
      _
    $region10: #{bert_encoder_forward.9} parent=5 // pred_check_branch
      %142 = sbr.rel (%p139) target = $region12
    $region11: #{bert_encoder_forward.9} parent=5 // pred_region
      %s143 = ssub.s32 %s9, 1
    $region12: #{bert_encoder_forward.9} parent=5 // pred_fallthru
      _
    %p144 = scmp.lt.s32.totalorder %s9, 2
    // Predicated region
    $region13: #{bert_encoder_forward.9} parent=5 // pred_check
      %p145 = pneg %p144
    $region14: #{bert_encoder_forward.9} parent=5 // pred_check_branch
      %147 = sbr.rel (%p145) target = $region16
    $region15: #{bert_encoder_forward.9} parent=5 // pred_region
      // Predicated region
      $region17: #{bert_encoder_forward.9} parent=15 // pred_check
        %p148 = pneg %p43
      $region18: #{bert_encoder_forward.9} parent=15 // pred_check_branch
        %150 = sbr.rel (%p148) target = $region20
      $region19: #{bert_encoder_forward.9} parent=15 // pred_region
        %p151 = scmp.lt.s32.totalorder %s16, 1
        %s152 = scalar_select %p151, %s16, 1
        %p153 = scmp.lt.s32.totalorder %s17, 0
        %s154 = scalar_select %p153, %s17, 0
        %s155 = sadd.s32 %s154, %s152
        %s156 = smul.addr %s155, 4
        %s157 = scalar_lea.vmem %s0, %s156
      $region20: #{bert_encoder_forward.9} parent=15 // pred_fallthru
        _
      // Predicated region
      $region21: #{bert_encoder_forward.9} parent=15 // pred_check
        %p158 = pneg %p69
      $region22: #{bert_encoder_forward.9} parent=15 // pred_check_branch
        %160 = sbr.rel (%p158) target = $region24
      $region23: #{bert_encoder_forward.9} parent=15 // pred_region
        %p161 = scmp.lt.s32.totalorder %s16, 1
        %s162 = scalar_select %p161, %s16, 1
        %s163 = smul.addr %s162, 4
        %s164 = scalar_lea.vmem %s1, %s163
      $region24: #{bert_encoder_forward.9} parent=15 // pred_fallthru
        _
      // Predicated region
      $region25: #{bert_encoder_forward.9} parent=15 // pred_check
        %p165 = pneg %p95
      $region26: #{bert_encoder_forward.9} parent=15 // pred_check_branch
        %167 = sbr.rel (%p165) target = $region28
      $region27: #{bert_encoder_forward.9} parent=15 // pred_region
        %p168 = scmp.lt.s32.totalorder %s16, 1
        %s169 = scalar_select %p168, %s16, 1
        %s170 = scalar_lea.vmem %s2, %s169
      $region28: #{bert_encoder_forward.9} parent=15 // pred_fallthru
        _
    $region16: #{bert_encoder_forward.9} parent=5 // pred_fallthru
      _
    %p171 = scmp.le.s32.totalorder 1, %s9
    %p172 = scmp.lt.s32.totalorder %s9, 3
    %p173 = pnand %p171, %p172
    %p174 = pneg %p173
    // Predicated region
    $region29: #{bert_encoder_forward.9} parent=5 // pred_check
      _
    $region30: #{bert_encoder_forward.9} parent=5 // pred_check_branch
      %176 = sbr.rel (%p173) target = $region32
    $region31: #{bert_encoder_forward.9} parent=5 // pred_region
      %s177 = ssub.s32 %s9, 1
      %p178 = scmp.lt.s32.totalorder %s18, 1
      %s179 = scalar_select %p178, %s18, 1
      %p180 = scmp.lt.s32.totalorder %s19, 0
      %s181 = scalar_select %p180, %s19, 0
      %s182 = sadd.s32 %s181, %s179
      %s183 = smul.addr %s182, 4
      %s184 = scalar_lea.vmem %s0, %s183
      %p185 = pneg %p49
      %p186 = pneg %p46
      %p187 = scmp.lt.s32.totalorder %s18, 1
      %s188 = scalar_select %p187, %s18, 1
      %s189 = smul.addr %s188, 4
      %s190 = scalar_lea.vmem %s1, %s189
      %p191 = pneg %p75
      %p192 = pneg %p72
      %p193 = scmp.lt.s32.totalorder %s18, 1
      %s194 = scalar_select %p193, %s18, 1
      %s195 = scalar_lea.vmem %s2, %s194
      %p196 = pneg %p101
      %p197 = pneg %p98
      %p198 = pneg %p129
      %p199 = pneg %p126
      %p200 = scmp.lt.s32.totalorder %s18, 1
      %s201 = scalar_select %p200, %s18, 1
      %p202 = scmp.lt.s32.totalorder %s19, 0
      %s203 = scalar_select %p202, %s19, 0
      %s204 = sadd.s32 %s203, %s201
      %s205 = smul.addr %s204, 4
      %s206 = scalar_lea.vmem %s3, %s205
      %p207 = scmp.lt.s32.totalorder %s18, 1
      %s208 = scalar_select %p207, %s18, 1
      %p209 = scmp.lt.s32.totalorder %s19, 0
      %s210 = scalar_select %p209, %s19, 0
      %s211 = sadd.s32 %s210, %s208
      %s212 = smul.addr %s211, 4
      %s213 = scalar_lea.vmem %s0, %s212
      %p214 = scmp.lt.s32.totalorder %s18, 1
      %s215 = scalar_select %p214, %s18, 1
      %s216 = smul.addr %s215, 4
      %s217 = scalar_lea.vmem %s1, %s216
      %p218 = scmp.lt.s32.totalorder %s18, 1
      %s219 = scalar_select %p218, %s18, 1
      %s220 = scalar_lea.vmem %s2, %s219
      %p221 = scmp.lt.s32.totalorder %s18, 1
      %s222 = scalar_select %p221, %s18, 1
      %p223 = scmp.lt.s32.totalorder %s19, 0
      %s224 = scalar_select %p223, %s19, 0
      %s225 = sadd.s32 %s224, %s222
      %s226 = smul.addr %s225, 4
      %s227 = scalar_lea.vmem %s3, %s226
      %v229 = vld [vmem:[%s213] sm:$0xf]
      %v230 = vld [vmem:[%s217] sm:$0xf]
      %v231 = vld [vmem:[%s220] sm:$0x1]
      %v233 = vunpack.c.l.b16 %v230
      %v234 = vpack.c.b16 %v233, %v233
      %235 = vrot.lane.b32.xlu0 %v234, 96
      %v236 = vpop.permute.xlu0 %235
      %vm237 = vcmask 64512
      %v239 = vsel %vm237, %v229, 0
      %v242 = vsel %vm237, %v236, 0
      %244 = vmatprep.subr.bf16.mxu0 0
      %245 = vmatpush1.bf16.xpose.msra.mxu0 %v242
      %246 = vmatprep.subr.bf16.mxu0 0
      %247 = vmatpush1.bf16.xpose.msra.mxu0 0
      %248 = vmatprep.subr.bf16.mxu0 0
      %249 = vmatpush1.bf16.xpose.msra.mxu0 0
      %250 = vmatprep.subr.bf16.mxu0 0
      %251 = vmatpush1.bf16.xpose.msra.mxu0 0
      %252 = vmatprep.subr.bf16.mxu0 0
      %253 = vmatpush1.bf16.xpose.msra.mxu0 0
      %254 = vmatprep.subr.bf16.mxu0 0
      %255 = vmatpush1.bf16.xpose.msra.mxu0 0
      %256 = vmatprep.subr.bf16.mxu0 0
      %257 = vmatpush1.bf16.xpose.msra.mxu0 0
      %258 = vmatprep.subr.bf16.mxu0 0
      %259 = vmatpush1.bf16.xpose.msra.mxu0 0
      %260 = vmatprep.subr.bf16.mxu0 0
      %261 = vmatpush1.bf16.xpose.msra.mxu0 0
      %262 = vmatprep.subr.bf16.mxu0 0
      %263 = vmatpush1.bf16.xpose.msra.mxu0 0
      %264 = vmatprep.subr.bf16.mxu0 0
      %265 = vmatpush1.bf16.xpose.msra.mxu0 0
      %266 = vmatprep.subr.bf16.mxu0 0
      %267 = vmatpush1.bf16.xpose.msra.mxu0 0
      %268 = vmatprep.subr.bf16.mxu0 0
      %269 = vmatpush1.bf16.xpose.msra.mxu0 0
      %270 = vmatprep.subr.bf16.mxu0 0
      %271 = vmatpush1.bf16.xpose.msra.mxu0 0
      %272 = vmatprep.subr.bf16.mxu0 0
      %273 = vmatpush1.bf16.xpose.msra.mxu0 0
      %274 = vmatprep.subr.bf16.mxu0 0
      %275 = vmatpush1.bf16.xpose.msra.mxu0 0
      %276 = vmatprep.mubr.bf16.mxu0 0
      %277 = vmatmul.mubr.bf16.gmra.mrb[0].mxu0 %v239
      %v278 = vpop.f32.mrb[0].mxu0
      %v279 = vadd.f32 0.0, %v278
      %v280 = vpop.f32.mrb[0].mxu0
      %v281 = vpop.f32.mrb[0].mxu0
      %v282 = vpop.f32.mrb[0].mxu0
      %283 = vdwg.mxu0
      %v284 = vmul.f32 %v279, 0.35355338
      %v286 = vlaneseq
      %v287 = vshrl.u32 %v286, 7
      %v288 = vsub.s32 0, %v287
      %v289 = vrot.slane %v231, %v288
      %v291 = vadd.f32 %v284, %v289
      %v292 = vsel %vm237, %v291, -inf
      %293 = vmax.xlane.f32.xlu0 %v292
      %v294 = vpop.xlane.xlu0 %293
      %v295 = vsub.f32 %v291, %v294
      %v296 = vmul.f32 %v295, 1.442695
      %v297 = vpow.pop %v296
      %v298 = vsel %vm237, %v297, 0.0
      %299 = vadd.xlane.f32.xlu0 %v298
      %v300 = vpop.xlane.xlu0 %299
      %v301 = vpack.c.bf16 %v297, %v297
      %302 = vrot.lane.b32.xlu0 %v234, 64
      %v303 = vpop.permute.xlu0 %302
      %v305 = vsel %vm237, %v301, 0
      %vm307 = vcmask 1043456
      %v309 = vsel %vm307, %v303, 0
      %311 = vmatprep.subr.bf16.mxu0 0
      %312 = vmatpush1.bf16.msra.mxu0 %v309
      %313 = vmatprep.subr.bf16.mxu0 0
      %314 = vmatpush1.bf16.msra.mxu0 0
      %315 = vmatprep.subr.bf16.mxu0 0
      %316 = vmatpush1.bf16.msra.mxu0 0
      %317 = vmatprep.subr.bf16.mxu0 0
      %318 = vmatpush1.bf16.msra.mxu0 0
      %319 = vmatprep.subr.bf16.mxu0 0
      %320 = vmatpush1.bf16.msra.mxu0 0
      %321 = vmatprep.subr.bf16.mxu0 0
      %322 = vmatpush1.bf16.msra.mxu0 0
      %323 = vmatprep.subr.bf16.mxu0 0
      %324 = vmatpush1.bf16.msra.mxu0 0
      %325 = vmatprep.subr.bf16.mxu0 0
      %326 = vmatpush1.bf16.msra.mxu0 0
      %327 = vmatprep.subr.bf16.mxu0 0
      %328 = vmatpush1.bf16.msra.mxu0 0
      %329 = vmatprep.subr.bf16.mxu0 0
      %330 = vmatpush1.bf16.msra.mxu0 0
      %331 = vmatprep.subr.bf16.mxu0 0
      %332 = vmatpush1.bf16.msra.mxu0 0
      %333 = vmatprep.subr.bf16.mxu0 0
      %334 = vmatpush1.bf16.msra.mxu0 0
      %335 = vmatprep.subr.bf16.mxu0 0
      %336 = vmatpush1.bf16.msra.mxu0 0
      %337 = vmatprep.subr.bf16.mxu0 0
      %338 = vmatpush1.bf16.msra.mxu0 0
      %339 = vmatprep.subr.bf16.mxu0 0
      %340 = vmatpush1.bf16.msra.mxu0 0
      %341 = vmatprep.subr.bf16.mxu0 0
      %342 = vmatpush1.bf16.msra.mxu0 0
      %343 = vmatprep.mubr.bf16.mxu0 0
      %344 = vmatmul.mubr.bf16.gmra.mrb[0].mxu0 %v305
      %v345 = vpop.f32.mrb[0].mxu0
      %v346 = vadd.f32 0.0, %v345
      %v347 = vpop.f32.mrb[0].mxu0
      %v348 = vpop.f32.mrb[0].mxu0
      %v349 = vpop.f32.mrb[0].mxu0
      %350 = vdwg.mxu0
      %v351 = vrcp.pop %v300
      %v352 = vmul.f32 %v346, %v351
      %v354 = vunpack.c.l.b16 %v229
      %v355 = vpack.c.b16 %v354, %v354
      %356 = vrot.lane.b32.xlu0 %v355, 120
      %v357 = vpop.permute.xlu0 %356
      %358 = vrot.lane.b32.xlu0 %v234, 88
      %v359 = vpop.permute.xlu0 %358
      %v361 = vsel %vm237, %v357, 0
      %v364 = vsel %vm237, %v359, 0
      %366 = vmatprep.subr.bf16.mxu0 0
      %367 = vmatpush1.bf16.xpose.msra.mxu0 %v364
      %368 = vmatprep.subr.bf16.mxu0 0
      %369 = vmatpush1.bf16.xpose.msra.mxu0 0
      %370 = vmatprep.subr.bf16.mxu0 0
      %371 = vmatpush1.bf16.xpose.msra.mxu0 0
      %372 = vmatprep.subr.bf16.mxu0 0
      %373 = vmatpush1.bf16.xpose.msra.mxu0 0
      %374 = vmatprep.subr.bf16.mxu0 0
      %375 = vmatpush1.bf16.xpose.msra.mxu0 0
      %376 = vmatprep.subr.bf16.mxu0 0
      %377 = vmatpush1.bf16.xpose.msra.mxu0 0
      %378 = vmatprep.subr.bf16.mxu0 0
      %379 = vmatpush1.bf16.xpose.msra.mxu0 0
      %380 = vmatprep.subr.bf16.mxu0 0
      %381 = vmatpush1.bf16.xpose.msra.mxu0 0
      %382 = vmatprep.subr.bf16.mxu0 0
      %383 = vmatpush1.bf16.xpose.msra.mxu0 0
      %384 = vmatprep.subr.bf16.mxu0 0
      %385 = vmatpush1.bf16.xpose.msra.mxu0 0
      %386 = vmatprep.subr.bf16.mxu0 0
      %387 = vmatpush1.bf16.xpose.msra.mxu0 0
      %388 = vmatprep.subr.bf16.mxu0 0
      %389 = vmatpush1.bf16.xpose.msra.mxu0 0
      %390 = vmatprep.subr.bf16.mxu0 0
      %391 = vmatpush1.bf16.xpose.msra.mxu0 0
      %392 = vmatprep.subr.bf16.mxu0 0
      %393 = vmatpush1.bf16.xpose.msra.mxu0 0
      %394 = vmatprep.subr.bf16.mxu0 0
      %395 = vmatpush1.bf16.xpose.msra.mxu0 0
      %396 = vmatprep.subr.bf16.mxu0 0
      %397 = vmatpush1.bf16.xpose.msra.mxu0 0
      %398 = vmatprep.mubr.bf16.mxu0 0
      %399 = vmatmul.mubr.bf16.gmra.mrb[0].mxu0 %v361
      %v400 = vpop.f32.mrb[0].mxu0
      %v401 = vadd.f32 0.0, %v400
      %v402 = vpop.f32.mrb[0].mxu0
      %v403 = vpop.f32.mrb[0].mxu0
      %v404 = vpop.f32.mrb[0].mxu0
      %405 = vdwg.mxu0
      %v406 = vmul.f32 %v401, 0.35355338
      %v407 = vadd.f32 %v406, %v289
      %v408 = vsel %vm237, %v407, -inf
      %409 = vmax.xlane.f32.xlu0 %v408
      %v410 = vpop.xlane.xlu0 %409
      %v411 = vsub.f32 %v407, %v410
      %v412 = vmul.f32 %v411, 1.442695
      %v413 = vpow.pop %v412
      %v414 = vsel %vm237, %v413, 0.0
      %415 = vadd.xlane.f32.xlu0 %v414
      %v416 = vpop.xlane.xlu0 %415
      %v417 = vpack.c.bf16 %v413, %v413
      %418 = vrot.lane.b32.xlu0 %v234, 56
      %v419 = vpop.permute.xlu0 %418
      %v421 = vsel %vm237, %v417, 0
      %v424 = vsel %vm307, %v419, 0
      %426 = vmatprep.subr.bf16.mxu0 0
      %427 = vmatpush1.bf16.msra.mxu0 %v424
      %428 = vmatprep.subr.bf16.mxu0 0
      %429 = vmatpush1.bf16.msra.mxu0 0
      %430 = vmatprep.subr.bf16.mxu0 0
      %431 = vmatpush1.bf16.msra.mxu0 0
      %432 = vmatprep.subr.bf16.mxu0 0
      %433 = vmatpush1.bf16.msra.mxu0 0
      %434 = vmatprep.subr.bf16.mxu0 0
      %435 = vmatpush1.bf16.msra.mxu0 0
      %436 = vmatprep.subr.bf16.mxu0 0
      %437 = vmatpush1.bf16.msra.mxu0 0
      %438 = vmatprep.subr.bf16.mxu0 0
      %439 = vmatpush1.bf16.msra.mxu0 0
      %440 = vmatprep.subr.bf16.mxu0 0
      %441 = vmatpush1.bf16.msra.mxu0 0
      %442 = vmatprep.subr.bf16.mxu0 0
      %443 = vmatpush1.bf16.msra.mxu0 0
      %444 = vmatprep.subr.bf16.mxu0 0
      %445 = vmatpush1.bf16.msra.mxu0 0
      %446 = vmatprep.subr.bf16.mxu0 0
      %447 = vmatpush1.bf16.msra.mxu0 0
      %448 = vmatprep.subr.bf16.mxu0 0
      %449 = vmatpush1.bf16.msra.mxu0 0
      %450 = vmatprep.subr.bf16.mxu0 0
      %451 = vmatpush1.bf16.msra.mxu0 0
      %452 = vmatprep.subr.bf16.mxu0 0
      %453 = vmatpush1.bf16.msra.mxu0 0
      %454 = vmatprep.subr.bf16.mxu0 0
      %455 = vmatpush1.bf16.msra.mxu0 0
      %456 = vmatprep.subr.bf16.mxu0 0
      %457 = vmatpush1.bf16.msra.mxu0 0
      %458 = vmatprep.mubr.bf16.mxu0 0
      %459 = vmatmul.mubr.bf16.gmra.mrb[0].mxu0 %v421
      %v460 = vpop.f32.mrb[0].mxu0
      %v461 = vadd.f32 0.0, %v460
      %v462 = vpop.f32.mrb[0].mxu0
      %v463 = vpop.f32.mrb[0].mxu0
      %v464 = vpop.f32.mrb[0].mxu0
      %465 = vdwg.mxu0
      %v466 = vrcp.pop %v416
      %v467 = vmul.f32 %v461, %v466
      %468 = vrot.lane.b32.xlu0 %v355, 112
      %v469 = vpop.permute.xlu0 %468
      %470 = vrot.lane.b32.xlu0 %v234, 80
      %v471 = vpop.permute.xlu0 %470
      %v473 = vsel %vm237, %v469, 0
      %v476 = vsel %vm237, %v471, 0
      %478 = vmatprep.subr.bf16.mxu0 0
      %479 = vmatpush1.bf16.xpose.msra.mxu0 %v476
      %480 = vmatprep.subr.bf16.mxu0 0
      %481 = vmatpush1.bf16.xpose.msra.mxu0 0
      %482 = vmatprep.subr.bf16.mxu0 0
      %483 = vmatpush1.bf16.xpose.msra.mxu0 0
      %484 = vmatprep.subr.bf16.mxu0 0
      %485 = vmatpush1.bf16.xpose.msra.mxu0 0
      %486 = vmatprep.subr.bf16.mxu0 0
      %487 = vmatpush1.bf16.xpose.msra.mxu0 0
      %488 = vmatprep.subr.bf16.mxu0 0
      %489 = vmatpush1.bf16.xpose.msra.mxu0 0
      %490 = vmatprep.subr.bf16.mxu0 0
      %491 = vmatpush1.bf16.xpose.msra.mxu0 0
      %492 = vmatprep.subr.bf16.mxu0 0
      %493 = vmatpush1.bf16.xpose.msra.mxu0 0
      %494 = vmatprep.subr.bf16.mxu0 0
      %495 = vmatpush1.bf16.xpose.msra.mxu0 0
      %496 = vmatprep.subr.bf16.mxu0 0
      %497 = vmatpush1.bf16.xpose.msra.mxu0 0
      %498 = vmatprep.subr.bf16.mxu0 0
      %499 = vmatpush1.bf16.xpose.msra.mxu0 0
      %500 = vmatprep.subr.bf16.mxu0 0
      %501 = vmatpush1.bf16.xpose.msra.mxu0 0
      %502 = vmatprep.subr.bf16.mxu0 0
      %503 = vmatpush1.bf16.xpose.msra.mxu0 0
      %504 = vmatprep.subr.bf16.mxu0 0
      %505 = vmatpush1.bf16.xpose.msra.mxu0 0
      %506 = vmatprep.subr.bf16.mxu0 0
      %507 = vmatpush1.bf16.xpose.msra.mxu0 0
      %508 = vmatprep.subr.bf16.mxu0 0
      %509 = vmatpush1.bf16.xpose.msra.mxu0 0
      %510 = vmatprep.mubr.bf16.mxu0 0
      %511 = vmatmul.mubr.bf16.gmra.mrb[0].mxu0 %v473
      %v512 = vpop.f32.mrb[0].mxu0
      %v513 = vadd.f32 0.0, %v512
      %v514 = vpop.f32.mrb[0].mxu0
      %v515 = vpop.f32.mrb[0].mxu0
      %v516 = vpop.f32.mrb[0].mxu0
      %517 = vdwg.mxu0
      %v518 = vmul.f32 %v513, 0.35355338
      %v519 = vadd.f32 %v518, %v289
      %v520 = vsel %vm237, %v519, -inf
      %521 = vmax.xlane.f32.xlu0 %v520
      %v522 = vpop.xlane.xlu0 %521
      %v523 = vsub.f32 %v519, %v522
      %v524 = vmul.f32 %v523, 1.442695
      %v525 = vpow.pop %v524
      %v526 = vsel %vm237, %v525, 0.0
      %527 = vadd.xlane.f32.xlu0 %v526
      %v528 = vpop.xlane.xlu0 %527
      %v529 = vpack.c.bf16 %v525, %v525
      %530 = vrot.lane.b32.xlu0 %v234, 48
      %v531 = vpop.permute.xlu0 %530
      %v533 = vsel %vm237, %v529, 0
      %v536 = vsel %vm307, %v531, 0
      %538 = vmatprep.subr.bf16.mxu0 0
      %539 = vmatpush1.bf16.msra.mxu0 %v536
      %540 = vmatprep.subr.bf16.mxu0 0
      %541 = vmatpush1.bf16.msra.mxu0 0
      %542 = vmatprep.subr.bf16.mxu0 0
      %543 = vmatpush1.bf16.msra.mxu0 0
      %544 = vmatprep.subr.bf16.mxu0 0
      %545 = vmatpush1.bf16.msra.mxu0 0
      %546 = vmatprep.subr.bf16.mxu0 0
      %547 = vmatpush1.bf16.msra.mxu0 0
      %548 = vmatprep.subr.bf16.mxu0 0
      %549 = vmatpush1.bf16.msra.mxu0 0
      %550 = vmatprep.subr.bf16.mxu0 0
      %551 = vmatpush1.bf16.msra.mxu0 0
      %552 = vmatprep.subr.bf16.mxu0 0
      %553 = vmatpush1.bf16.msra.mxu0 0
      %554 = vmatprep.subr.bf16.mxu0 0
      %555 = vmatpush1.bf16.msra.mxu0 0
      %556 = vmatprep.subr.bf16.mxu0 0
      %557 = vmatpush1.bf16.msra.mxu0 0
      %558 = vmatprep.subr.bf16.mxu0 0
      %559 = vmatpush1.bf16.msra.mxu0 0
      %560 = vmatprep.subr.bf16.mxu0 0
      %561 = vmatpush1.bf16.msra.mxu0 0
      %562 = vmatprep.subr.bf16.mxu0 0
      %563 = vmatpush1.bf16.msra.mxu0 0
      %564 = vmatprep.subr.bf16.mxu0 0
      %565 = vmatpush1.bf16.msra.mxu0 0
      %566 = vmatprep.subr.bf16.mxu0 0
      %567 = vmatpush1.bf16.msra.mxu0 0
      %568 = vmatprep.subr.bf16.mxu0 0
      %569 = vmatpush1.bf16.msra.mxu0 0
      %570 = vmatprep.mubr.bf16.mxu0 0
      %571 = vmatmul.mubr.bf16.gmra.mrb[0].mxu0 %v533
      %v572 = vpop.f32.mrb[0].mxu0
      %v573 = vadd.f32 0.0, %v572
      %v574 = vpop.f32.mrb[0].mxu0
      %v575 = vpop.f32.mrb[0].mxu0
      %v576 = vpop.f32.mrb[0].mxu0
      %577 = vdwg.mxu0
      %v578 = vrcp.pop %v528
      %v579 = vmul.f32 %v573, %v578
      %580 = vrot.lane.b32.xlu0 %v355, 104
      %v581 = vpop.permute.xlu0 %580
      %582 = vrot.lane.b32.xlu0 %v234, 72
      %v583 = vpop.permute.xlu0 %582
      %v585 = vsel %vm237, %v581, 0
      %v588 = vsel %vm237, %v583, 0
      %590 = vmatprep.subr.bf16.mxu0 0
      %591 = vmatpush1.bf16.xpose.msra.mxu0 %v588
      %592 = vmatprep.subr.bf16.mxu0 0
      %593 = vmatpush1.bf16.xpose.msra.mxu0 0
      %594 = vmatprep.subr.bf16.mxu0 0
      %595 = vmatpush1.bf16.xpose.msra.mxu0 0
      %596 = vmatprep.subr.bf16.mxu0 0
      %597 = vmatpush1.bf16.xpose.msra.mxu0 0
      %598 = vmatprep.subr.bf16.mxu0 0
      %599 = vmatpush1.bf16.xpose.msra.mxu0 0
      %600 = vmatprep.subr.bf16.mxu0 0
      %601 = vmatpush1.bf16.xpose.msra.mxu0 0
      %602 = vmatprep.subr.bf16.mxu0 0
      %603 = vmatpush1.bf16.xpose.msra.mxu0 0
      %604 = vmatprep.subr.bf16.mxu0 0
      %605 = vmatpush1.bf16.xpose.msra.mxu0 0
      %606 = vmatprep.subr.bf16.mxu0 0
      %607 = vmatpush1.bf16.xpose.msra.mxu0 0
      %608 = vmatprep.subr.bf16.mxu0 0
      %609 = vmatpush1.bf16.xpose.msra.mxu0 0
      %610 = vmatprep.subr.bf16.mxu0 0
      %611 = vmatpush1.bf16.xpose.msra.mxu0 0
      %612 = vmatprep.subr.bf16.mxu0 0
      %613 = vmatpush1.bf16.xpose.msra.mxu0 0
      %614 = vmatprep.subr.bf16.mxu0 0
      %615 = vmatpush1.bf16.xpose.msra.mxu0 0
      %616 = vmatprep.subr.bf16.mxu0 0
      %617 = vmatpush1.bf16.xpose.msra.mxu0 0
      %618 = vmatprep.subr.bf16.mxu0 0
      %619 = vmatpush1.bf16.xpose.msra.mxu0 0
      %620 = vmatprep.subr.bf16.mxu0 0
      %621 = vmatpush1.bf16.xpose.msra.mxu0 0
      %622 = vmatprep.mubr.bf16.mxu0 0
      %623 = vmatmul.mubr.bf16.gmra.mrb[0].mxu0 %v585
      %v624 = vpop.f32.mrb[0].mxu0
      %v625 = vadd.f32 0.0, %v624
      %v626 = vpop.f32.mrb[0].mxu0
      %v627 = vpop.f32.mrb[0].mxu0
      %v628 = vpop.f32.mrb[0].mxu0
      %629 = vdwg.mxu0
      %v630 = vmul.f32 %v625, 0.35355338
      %v631 = vadd.f32 %v630, %v289
      %v632 = vsel %vm237, %v631, -inf
      %633 = vmax.xlane.f32.xlu0 %v632
      %v634 = vpop.xlane.xlu0 %633
      %v635 = vsub.f32 %v631, %v634
      %v636 = vmul.f32 %v635, 1.442695
      %v637 = vpow.pop %v636
      %v638 = vsel %vm237, %v637, 0.0
      %639 = vadd.xlane.f32.xlu0 %v638
      %v640 = vpop.xlane.xlu0 %639
      %v641 = vpack.c.bf16 %v637, %v637
      %642 = vrot.lane.b32.xlu0 %v234, 40
      %v643 = vpop.permute.xlu0 %642
      %v645 = vsel %vm237, %v641, 0
      %v648 = vsel %vm307, %v643, 0
      %650 = vmatprep.subr.bf16.mxu0 0
      %651 = vmatpush1.bf16.msra.mxu0 %v648
      %652 = vmatprep.subr.bf16.mxu0 0
      %653 = vmatpush1.bf16.msra.mxu0 0
      %654 = vmatprep.subr.bf16.mxu0 0
      %655 = vmatpush1.bf16.msra.mxu0 0
      %656 = vmatprep.subr.bf16.mxu0 0
      %657 = vmatpush1.bf16.msra.mxu0 0
      %658 = vmatprep.subr.bf16.mxu0 0
      %659 = vmatpush1.bf16.msra.mxu0 0
      %660 = vmatprep.subr.bf16.mxu0 0
      %661 = vmatpush1.bf16.msra.mxu0 0
      %662 = vmatprep.subr.bf16.mxu0 0
      %663 = vmatpush1.bf16.msra.mxu0 0
      %664 = vmatprep.subr.bf16.mxu0 0
      %665 = vmatpush1.bf16.msra.mxu0 0
      %666 = vmatprep.subr.bf16.mxu0 0
      %667 = vmatpush1.bf16.msra.mxu0 0
      %668 = vmatprep.subr.bf16.mxu0 0
      %669 = vmatpush1.bf16.msra.mxu0 0
      %670 = vmatprep.subr.bf16.mxu0 0
      %671 = vmatpush1.bf16.msra.mxu0 0
      %672 = vmatprep.subr.bf16.mxu0 0
      %673 = vmatpush1.bf16.msra.mxu0 0
      %674 = vmatprep.subr.bf16.mxu0 0
      %675 = vmatpush1.bf16.msra.mxu0 0
      %676 = vmatprep.subr.bf16.mxu0 0
      %677 = vmatpush1.bf16.msra.mxu0 0
      %678 = vmatprep.subr.bf16.mxu0 0
      %679 = vmatpush1.bf16.msra.mxu0 0
      %680 = vmatprep.subr.bf16.mxu0 0
      %681 = vmatpush1.bf16.msra.mxu0 0
      %682 = vmatprep.mubr.bf16.mxu0 0
      %683 = vmatmul.mubr.bf16.gmra.mrb[0].mxu0 %v645
      %v684 = vpop.f32.mrb[0].mxu0
      %v685 = vadd.f32 0.0, %v684
      %v686 = vpop.f32.mrb[0].mxu0
      %v687 = vpop.f32.mrb[0].mxu0
      %v688 = vpop.f32.mrb[0].mxu0
      %689 = vdwg.mxu0
      %v690 = vrcp.pop %v640
      %v691 = vmul.f32 %v685, %v690
      %693 = vrot.lane.b32.xlu0 %v467, 8
      %v694 = vpop.permute.xlu0 %693
      %697 = vrot.lane.b32.xlu0 %v579, 16
      %v698 = vpop.permute.xlu0 %697
      %701 = vrot.lane.b32.xlu0 %v691, 24
      %v702 = vpop.permute.xlu0 %701
      %v704 = vsel %vm237, %v352, %v694
      %vm705 = vcmask 130048
      %v706 = vsel %vm705, %v704, %v698
      %vm707 = vcmask 195584
      %v708 = vsel %vm707, %v706, %v702
      %v709 = vpack.c.bf16 %v708, %v708
      %vm710 = vcmask 257024
      %711 = vst.msk [vmem:[%s227] sm:$0xf] %vm710, %v709
      %p712 = scmp.lt.s32.totalorder %s18, 1
      %s713 = scalar_select %p712, %s18, 1
      %p714 = scmp.lt.s32.totalorder %s19, 0
      %s715 = scalar_select %p714, %s19, 0
      %s716 = sadd.s32 %s715, %s713
      %s717 = smul.addr %s716, 4
      %s718 = scalar_lea.vmem %s3, %s717
      // Predicated region
      $region33: #{bert_encoder_forward.9} parent=31 // pred_check
        %p719 = pneg %p126
      $region34: #{bert_encoder_forward.9} parent=31 // pred_check_branch
        %721 = sbr.rel (%p719) target = $region36
      $region35: #{bert_encoder_forward.9} parent=31 // pred_region
        _
      $region36: #{bert_encoder_forward.9} parent=31 // pred_fallthru
        _
    $region32: #{bert_encoder_forward.9} parent=5 // pred_fallthru
      _
    %p722 = scmp.le.s32.totalorder 2, %s9
    // Predicated region
    $region37: #{bert_encoder_forward.9} parent=5 // pred_check
      %p723 = pneg %p722
    $region38: #{bert_encoder_forward.9} parent=5 // pred_check_branch
      %725 = sbr.rel (%p723) target = $region40
    $region39: #{bert_encoder_forward.9} parent=5 // pred_region
      %s726 = ssub.s32 %s9, 2
      // Predicated region
      $region41: #{bert_encoder_forward.9} parent=39 // pred_check
        %p727 = pneg %p132
      $region42: #{bert_encoder_forward.9} parent=39 // pred_check_branch
        %729 = sbr.rel (%p727) target = $region44
      $region43: #{bert_encoder_forward.9} parent=39 // pred_region
        %p730 = scmp.lt.s32.totalorder %s20, 1
        %s731 = scalar_select %p730, %s20, 1
        %p732 = scmp.lt.s32.totalorder %s21, 0
        %s733 = scalar_select %p732, %s21, 0
        %s734 = sadd.s32 %s733, %s731
        %s735 = smul.addr %s734, 4
        %s736 = scalar_lea.vmem %s3, %s735
      $region44: #{bert_encoder_forward.9} parent=39 // pred_fallthru
        _
    $region40: #{bert_encoder_forward.9} parent=5 // pred_fallthru
      _
  $region6: #{bert_encoder_forward.9} parent=0 // loop_footer
    %s13 = sadd.s32 1, %s9
  $region7: #{bert_encoder_forward.9} parent=0 // loop_footer_branch
    %8 = sbr.rel target = $region3
  $region8: #{bert_encoder_forward.9} parent=0 // loop_exit
    _

// kernel: bert_encoder_forward.11
$region0: #{bert_encoder_forward.11}
  #allocation0 [shape = 'u32[]', space=smem, size = 0x4, offset = 0x4, fixed_abs, tag = 'smem constant byte address 0x4 - core index']
  #allocation1 [shape = 'u32[144,128]{1,0:T(1,128)}', space=vmem, size = 0x12000, scoped, tag = 'internal scratch']
  #allocation2 [shape = 'f32[16,32]{1,0:T(8,128)}', space=vmem, size = 0x2000, scoped, tag = 'scratch operand']
  %s0 = inlined_call_operand.vmem [shape: bf16[16,32], index: 0, kind: input, shape index: {}, may-alias: {0,5}]
  %s1 = inlined_call_operand.vmem [shape: bf16[32,128], index: 1, kind: input, shape index: {}]
  %s2 = inlined_call_operand.vmem [shape: f32[1,128], index: 2, kind: input, shape index: {}]
  %s3 = inlined_call_operand.vmem [shape: bf16[128,32], index: 3, kind: input, shape index: {}]
  %s4 = inlined_call_operand.vmem [shape: f32[1,32], index: 4, kind: input, shape index: {}]
  %s5 = inlined_call_operand.vmem [shape: bf16[16,32], index: 5, kind: input, shape index: {}, may-alias: {0,5}]
  %s6 = inlined_call_operand.vmem [shape: f32[1,32], index: 6, kind: input, shape index: {}]
  %s7 = inlined_call_operand.vmem [shape: f32[1,32], index: 7, kind: input, shape index: {}]
  %s8 = inlined_call_operand.vmem [shape: bf16[16,32], index: 8, kind: output, shape index: {}]
  %s9 = sld [smem:[#allocation0]]
  $region50: #{bert_encoder_forward.11} parent=0
    _
  %s11 = ssub.s32 1, %s9
  %s12 = scalar_select 0, %s11, %s9
  // Predicated region
  $region2: #{bert_encoder_forward.11} parent=0 // pred_check
    _
  $region3: #{bert_encoder_forward.11} parent=0 // pred_check_branch
    %14 = sbr.rel (0) target = $region5
  $region4: #{bert_encoder_forward.11} parent=0 // pred_region
    _
  $region5: #{bert_encoder_forward.11} parent=0 // pred_fallthru
    _
  // Predicated region
  $region6: #{bert_encoder_forward.11} parent=0 // pred_check
    _
  $region7: #{bert_encoder_forward.11} parent=0 // pred_check_branch
    %16 = sbr.rel (0) target = $region9
  $region8: #{bert_encoder_forward.11} parent=0 // pred_region
    _
  $region9: #{bert_encoder_forward.11} parent=0 // pred_fallthru
    _
  // Predicated region
  $region10: #{bert_encoder_forward.11} parent=0 // pred_check
    _
  $region11: #{bert_encoder_forward.11} parent=0 // pred_check_branch
    %18 = sbr.rel (0) target = $region13
  $region12: #{bert_encoder_forward.11} parent=0 // pred_region
    _
  $region13: #{bert_encoder_forward.11} parent=0 // pred_fallthru
    _
  // Predicated region
  $region14: #{bert_encoder_forward.11} parent=0 // pred_check
    _
  $region15: #{bert_encoder_forward.11} parent=0 // pred_check_branch
    %20 = sbr.rel (0) target = $region17
  $region16: #{bert_encoder_forward.11} parent=0 // pred_region
    _
  $region17: #{bert_encoder_forward.11} parent=0 // pred_fallthru
    _
  // Predicated region
  $region18: #{bert_encoder_forward.11} parent=0 // pred_check
    _
  $region19: #{bert_encoder_forward.11} parent=0 // pred_check_branch
    %22 = sbr.rel (0) target = $region21
  $region20: #{bert_encoder_forward.11} parent=0 // pred_region
    _
  $region21: #{bert_encoder_forward.11} parent=0 // pred_fallthru
    _
  // Predicated region
  $region22: #{bert_encoder_forward.11} parent=0 // pred_check
    _
  $region23: #{bert_encoder_forward.11} parent=0 // pred_check_branch
    %24 = sbr.rel (0) target = $region25
  $region24: #{bert_encoder_forward.11} parent=0 // pred_region
    _
  $region25: #{bert_encoder_forward.11} parent=0 // pred_fallthru
    _
  // Predicated region
  $region26: #{bert_encoder_forward.11} parent=0 // pred_check
    _
  $region27: #{bert_encoder_forward.11} parent=0 // pred_check_branch
    %26 = sbr.rel (0) target = $region29
  $region28: #{bert_encoder_forward.11} parent=0 // pred_region
    _
  $region29: #{bert_encoder_forward.11} parent=0 // pred_fallthru
    _
  // Predicated region
  $region30: #{bert_encoder_forward.11} parent=0 // pred_check
    _
  $region31: #{bert_encoder_forward.11} parent=0 // pred_check_branch
    %28 = sbr.rel (0) target = $region33
  $region32: #{bert_encoder_forward.11} parent=0 // pred_region
    _
  $region33: #{bert_encoder_forward.11} parent=0 // pred_fallthru
    _
  %p30 = scmp.eq.s32.totalorder 0, 0
  // Predicated region
  $region34: #{bert_encoder_forward.11} parent=0 // pred_check
    %p31 = pneg %p30
  $region35: #{bert_encoder_forward.11} parent=0 // pred_check_branch
    %33 = sbr.rel (%p31) target = $region37
  $region36: #{bert_encoder_forward.11} parent=0 // pred_region
    %vm34 = vcmask 261120
    %35 = vst.msk [vmem:[#allocation2] sm:$0xff] %vm34, 0.0
    %36 = vst.msk [vmem:[#allocation2 + $0x8] sm:$0xff] %vm34, 0.0
  $region37: #{bert_encoder_forward.11} parent=0 // pred_fallthru
    _
  %v37 = vld [vmem:[%s0] sm:$0xf]
  %v38 = vld [vmem:[%s0 + $0x4] sm:$0xf]
  %v39 = vld [vmem:[%s1] sm:$0xf]
  %v40 = vld [vmem:[%s1 + $0x4] sm:$0xf]
  %v41 = vld [vmem:[%s1 + $0x8] sm:$0xf]
  %v42 = vld [vmem:[%s1 + $0xc] sm:$0xf]
  %v43 = vld [vmem:[%s2] sm:$0x1]
  %v45 = vlaneseq
  %v46 = vshrl.u32 %v45, 7
  %v47 = vsub.s32 0, %v46
  %v48 = vrot.slane %v43, %v47
  %v52 = vunpack.c.l.b16 %v37
  %v53 = vunpack.c.l.b16 %v38
  %v54 = vpack.c.b16 %v53, %v52
  %v59 = vunpack.c.l.b16 %v39
  %v60 = vunpack.c.l.b16 %v40
  %v61 = vunpack.c.l.b16 %v41
  %v62 = vunpack.c.l.b16 %v42
  %v63 = vpack.c.b16 %v60, %v59
  %v64 = vpack.c.b16 %v62, %v61
  %vm67 = vcmask 261120
  %v69 = vsel %vm67, %v54, 0
  %71 = vmatprep.subr.bf16.mxu0 0
  %72 = vmatpush1.bf16.msra.mxu0 %v63
  %73 = vmatprep.subr.bf16.mxu0 0
  %74 = vmatpush1.bf16.msra.mxu0 %v64
  %75 = vmatprep.subr.bf16.mxu0 0
  %76 = vmatpush1.bf16.msra.mxu0 0
  %77 = vmatprep.subr.bf16.mxu0 0
  %78 = vmatpush1.bf16.msra.mxu0 0
  %79 = vmatprep.subr.bf16.mxu0 0
  %80 = vmatpush1.bf16.msra.mxu0 0
  %81 = vmatprep.subr.bf16.mxu0 0
  %82 = vmatpush1.bf16.msra.mxu0 0
  %83 = vmatprep.subr.bf16.mxu0 0
  %84 = vmatpush1.bf16.msra.mxu0 0
  %85 = vmatprep.subr.bf16.mxu0 0
  %86 = vmatpush1.bf16.msra.mxu0 0
  %87 = vmatprep.subr.bf16.mxu0 0
  %88 = vmatpush1.bf16.msra.mxu0 0
  %89 = vmatprep.subr.bf16.mxu0 0
  %90 = vmatpush1.bf16.msra.mxu0 0
  %91 = vmatprep.subr.bf16.mxu0 0
  %92 = vmatpush1.bf16.msra.mxu0 0
  %93 = vmatprep.subr.bf16.mxu0 0
  %94 = vmatpush1.bf16.msra.mxu0 0
  %95 = vmatprep.subr.bf16.mxu0 0
  %96 = vmatpush1.bf16.msra.mxu0 0
  %97 = vmatprep.subr.bf16.mxu0 0
  %98 = vmatpush1.bf16.msra.mxu0 0
  %99 = vmatprep.subr.bf16.mxu0 0
  %100 = vmatpush1.bf16.msra.mxu0 0
  %101 = vmatprep.subr.bf16.mxu0 0
  %102 = vmatpush1.bf16.msra.mxu0 0
  %103 = vmatprep.mubr.bf16.mxu0 0
  %104 = vmatmul.mubr.bf16.gmra.mrb[0].mxu0 %v69
  %v105 = vpop.f32.mrb[0].mxu0
  %v106 = vadd.f32 %v48, %v105
  %v107 = vpop.f32.mrb[0].mxu0
  %v108 = vpop.f32.mrb[0].mxu0
  %v109 = vadd.f32 %v48, %v108
  %v110 = vpop.f32.mrb[0].mxu0
  %111 = vdwg.mxu0
  %v112 = vmul.f32 %v106, 0.5
  %v113 = vmul.f32 %v109, 0.5
  %v114 = vmul.f32 %v106, 0.70710677
  %v115 = vmul.f32 %v109, 0.70710677
  %v116 = verf.f32.pop %v114
  %v117 = verf.f32.pop %v115
  %v118 = vadd.f32 %v116, 1.0
  %v119 = vadd.f32 %v117, 1.0
  %v120 = vmul.f32 %v112, %v118
  %v121 = vmul.f32 %v113, %v119
  %v122 = vld [vmem:[#allocation2] sm:$0xff]
  %v123 = vld [vmem:[#allocation2 + $0x8] sm:$0xff]
  %v124 = vpack.c.bf16 %v121, %v120
  %v125 = vld [vmem:[%s3] sm:$0xf]
  %v126 = vld [vmem:[%s3 + $0x4] sm:$0xf]
  %v127 = vld [vmem:[%s3 + $0x8] sm:$0xf]
  %v128 = vld [vmem:[%s3 + $0xc] sm:$0xf]
  %v129 = vld [vmem:[%s3 + $0x10] sm:$0xf]
  %v130 = vld [vmem:[%s3 + $0x14] sm:$0xf]
  %v131 = vld [vmem:[%s3 + $0x18] sm:$0xf]
  %v132 = vld [vmem:[%s3 + $0x1c] sm:$0xf]
  %v133 = vld [vmem:[%s3 + $0x20] sm:$0xf]
  %v134 = vld [vmem:[%s3 + $0x24] sm:$0xf]
  %v135 = vld [vmem:[%s3 + $0x28] sm:$0xf]
  %v136 = vld [vmem:[%s3 + $0x2c] sm:$0xf]
  %v137 = vld [vmem:[%s3 + $0x30] sm:$0xf]
  %v138 = vld [vmem:[%s3 + $0x34] sm:$0xf]
  %v139 = vld [vmem:[%s3 + $0x38] sm:$0xf]
  %v140 = vld [vmem:[%s3 + $0x3c] sm:$0xf]
  %v157 = vunpack.c.l.b16 %v125
  %v158 = vunpack.c.l.b16 %v126
  %v159 = vunpack.c.l.b16 %v127
  %v160 = vunpack.c.l.b16 %v128
  %v161 = vunpack.c.l.b16 %v129
  %v162 = vunpack.c.l.b16 %v130
  %v163 = vunpack.c.l.b16 %v131
  %v164 = vunpack.c.l.b16 %v132
  %v165 = vunpack.c.l.b16 %v133
  %v166 = vunpack.c.l.b16 %v134
  %v167 = vunpack.c.l.b16 %v135
  %v168 = vunpack.c.l.b16 %v136
  %v169 = vunpack.c.l.b16 %v137
  %v170 = vunpack.c.l.b16 %v138
  %v171 = vunpack.c.l.b16 %v139
  %v172 = vunpack.c.l.b16 %v140
  %v173 = vpack.c.b16 %v158, %v157
  %v174 = vpack.c.b16 %v160, %v159
  %v175 = vpack.c.b16 %v162, %v161
  %v176 = vpack.c.b16 %v164, %v163
  %v177 = vpack.c.b16 %v166, %v165
  %v178 = vpack.c.b16 %v168, %v167
  %v179 = vpack.c.b16 %v170, %v169
  %v180 = vpack.c.b16 %v172, %v171
  %189 = vmatprep.subr.bf16.mxu0 0
  %190 = vmatpush1.bf16.msra.mxu0 %v173
  %191 = vmatprep.subr.bf16.mxu0 0
  %192 = vmatpush1.bf16.msra.mxu0 %v174
  %193 = vmatprep.subr.bf16.mxu0 0
  %194 = vmatpush1.bf16.msra.mxu0 %v175
  %195 = vmatprep.subr.bf16.mxu0 0
  %196 = vmatpush1.bf16.msra.mxu0 %v176
  %197 = vmatprep.subr.bf16.mxu0 0
  %198 = vmatpush1.bf16.msra.mxu0 %v177
  %199 = vmatprep.subr.bf16.mxu0 0
  %200 = vmatpush1.bf16.msra.mxu0 %v178
  %201 = vmatprep.subr.bf16.mxu0 0
  %202 = vmatpush1.bf16.msra.mxu0 %v179
  %203 = vmatprep.subr.bf16.mxu0 0
  %204 = vmatpush1.bf16.msra.mxu0 %v180
  %205 = vmatprep.subr.bf16.mxu0 0
  %206 = vmatpush1.bf16.msra.mxu0 0
  %207 = vmatprep.subr.bf16.mxu0 0
  %208 = vmatpush1.bf16.msra.mxu0 0
  %209 = vmatprep.subr.bf16.mxu0 0
  %210 = vmatpush1.bf16.msra.mxu0 0
  %211 = vmatprep.subr.bf16.mxu0 0
  %212 = vmatpush1.bf16.msra.mxu0 0
  %213 = vmatprep.subr.bf16.mxu0 0
  %214 = vmatpush1.bf16.msra.mxu0 0
  %215 = vmatprep.subr.bf16.mxu0 0
  %216 = vmatpush1.bf16.msra.mxu0 0
  %217 = vmatprep.subr.bf16.mxu0 0
  %218 = vmatpush1.bf16.msra.mxu0 0
  %219 = vmatprep.subr.bf16.mxu0 0
  %220 = vmatpush1.bf16.msra.mxu0 0
  %221 = vmatprep.mubr.bf16.mxu0 0
  %222 = vmatmul.mubr.bf16.gmra.mrb[0].mxu0 %v124
  %v223 = vpop.f32.mrb[0].mxu0
  %v224 = vadd.f32 0.0, %v223
  %v225 = vpop.f32.mrb[0].mxu0
  %v226 = vpop.f32.mrb[0].mxu0
  %v227 = vadd.f32 0.0, %v226
  %v228 = vpop.f32.mrb[0].mxu0
  %229 = vdwg.mxu0
  %v230 = vadd.f32 %v122, %v224
  %v231 = vadd.f32 %v123, %v227
  %232 = vst.msk [vmem:[#allocation2] sm:$0xff] %vm67, %v230
  %233 = vst.msk [vmem:[#allocation2 + $0x8] sm:$0xff] %vm67, %v231
  // Predicated region
  $region38: #{bert_encoder_forward.11} parent=0 // pred_check
    %p234 = pneg %p30
  $region39: #{bert_encoder_forward.11} parent=0 // pred_check_branch
    %236 = sbr.rel (%p234) target = $region41
  $region40: #{bert_encoder_forward.11} parent=0 // pred_region
    %v237 = vld [vmem:[#allocation2] sm:$0xff]
    %v238 = vld [vmem:[#allocation2 + $0x8] sm:$0xff]
    %v239 = vld [vmem:[%s4] sm:$0x1]
    %v241 = vlaneseq
    %v242 = vshrl.u32 %v241, 7
    %v243 = vsub.s32 0, %v242
    %v244 = vrot.slane %v239, %v243
    %v246 = vadd.f32 %v237, %v244
    %v247 = vadd.f32 %v238, %v244
    %v248 = vld [vmem:[%s5] sm:$0xf]
    %v249 = vld [vmem:[%s5 + $0x4] sm:$0xf]
    %v250 = vunpack.c.l.bf16 %v248
    %v251 = vunpack.c.l.bf16 %v249
    %v252 = vadd.f32 %v246, %v250
    %v253 = vadd.f32 %v247, %v251
    %v254 = vsel %vm67, %v252, 0.0
    %255 = vadd.xlane.f32.xlu0 %v254
    %v256 = vpop.xlane.xlu0 %255
    %v257 = vsel %vm67, %v253, 0.0
    %258 = vadd.xlane.f32.xlu0 %v257
    %v259 = vpop.xlane.xlu0 %258
    %v260 = vrcp.pop 32.0
    %v261 = vmul.f32 %v256, %v260
    %v262 = vmul.f32 %v259, %v260
    %v263 = vsub.f32 %v252, %v261
    %v264 = vsub.f32 %v253, %v262
    %v265 = vmul.f32 %v263, %v263
    %v266 = vmul.f32 %v264, %v264
    %v267 = vsel %vm67, %v265, 0.0
    %268 = vadd.xlane.f32.xlu0 %v267
    %v269 = vpop.xlane.xlu0 %268
    %v270 = vsel %vm67, %v266, 0.0
    %271 = vadd.xlane.f32.xlu0 %v270
    %v272 = vpop.xlane.xlu0 %271
    %v273 = vmul.f32 %v269, %v260
    %v274 = vmul.f32 %v272, %v260
    %v275 = vadd.f32 %v273, 1e-12
    %v276 = vadd.f32 %v274, 1e-12
    %v277 = vrsqrt.pop %v275
    %v278 = vrsqrt.pop %v276
    %v279 = vmul.f32 %v263, %v277
    %v280 = vmul.f32 %v264, %v278
    %v281 = vld [vmem:[%s6] sm:$0x1]
    %v283 = vlaneseq
    %v284 = vshrl.u32 %v283, 7
    %v285 = vsub.s32 0, %v284
    %v286 = vrot.slane %v281, %v285
    %v288 = vmul.f32 %v279, %v286
    %v289 = vmul.f32 %v280, %v286
    %v290 = vld [vmem:[%s7] sm:$0x1]
    %v292 = vlaneseq
    %v293 = vshrl.u32 %v292, 7
    %v294 = vsub.s32 0, %v293
    %v295 = vrot.slane %v290, %v294
    %v297 = vadd.f32 %v288, %v295
    %v298 = vadd.f32 %v289, %v295
    %v299 = vpack.c.bf16 %v298, %v297
    %v301 = vunpack.c.l.b16 %v299
    %v302 = vunpack.c.h.b16 %v299
    %v303 = vpack.c.b16 %v301, %v301
    %v304 = vpack.c.b16 %v302, %v302
    %vm307 = vcmask 257024
    %308 = vst.msk [vmem:[%s8] sm:$0xf] %vm307, %v303
    %309 = vst.msk [vmem:[%s8 + $0x4] sm:$0xf] %vm307, %v304
  $region41: #{bert_encoder_forward.11} parent=0 // pred_fallthru
    _
  // Predicated region
  $region42: #{bert_encoder_forward.11} parent=0 // pred_check
    _
  $region43: #{bert_encoder_forward.11} parent=0 // pred_check_branch
    %311 = sbr.rel (0) target = $region45
  $region44: #{bert_encoder_forward.11} parent=0 // pred_region
    _
  $region45: #{bert_encoder_forward.11} parent=0 // pred_fallthru
    _
  // Predicated region
  $region46: #{bert_encoder_forward.11} parent=0 // pred_check
    _
  $region47: #{bert_encoder_forward.11} parent=0 // pred_check_branch
    %313 = sbr.rel (0) target = $region49
  $region48: #{bert_encoder_forward.11} parent=0 // pred_region
    _
  $region49: #{bert_encoder_forward.11} parent=0 // pred_fallthru
    _

</llo_original>
